<compile_context>
chip_gen: v6e
topology: v6e:2x2x1
jax: 0.10.0
libtpu: 0.0.40
codegen_flags: <defaults>
</compile_context>

<pallas_src>
import numpy as np
import jax
import jax.numpy as jnp
from jax.experimental import pallas as pl
from jax.experimental.pallas import tpu as pltpu


def _projection_kernel(x_ref, p_ref, pt_ref, o_ref):
    """One grid step computes out[:, i] for a single output channel i.

    Block shapes seen by the kernel:
      x_ref : (B, Cin, M,  N )   -- full x, resident in VMEM across grid steps
      p_ref : (1, Cin, Mp, M )   -- P[i]
      pt_ref: (1, Cin, N,  Np)   -- PT[i]
      o_ref : (B, 1,  Mp, Np)    -- out[:, i]
    """
    B = x_ref.shape[0]
    Cin = x_ref.shape[1]
    for b in range(B):                       # static unroll (B is small)
        acc = None
        for j in range(Cin):                 # static unroll (Cin is small)
            # Stage 1: left multiply; intermediate lives in vregs/VMEM only.
            t = jnp.dot(p_ref[0, j], x_ref[b, j],
                        preferred_element_type=jnp.float32)
            # Stage 2: right multiply and accumulate over j.
            z = jnp.dot(t, pt_ref[0, j],
                        preferred_element_type=jnp.float32)
            acc = z if acc is None else acc + z
        # Single direct store per output block (no RMW accumulation in HBM/VMEM).
        o_ref[b, 0] = acc.astype(o_ref.dtype)


def projection_forward(x, P, PT):
    """x: [B,Cin,M,N], P: [Cout,Cin,Mp,M], PT: [Cout,Cin,N,Np] -> [B,Cout,Mp,Np] f32."""
    x = x.astype(jnp.float32)
    P = P.astype(jnp.float32)
    PT = PT.astype(jnp.float32)

    B, Cin, M, N = x.shape
    Cout, _, Mp, _ = P.shape
    Np_ = PT.shape[-1]

    # Advisory cost hint so XLA schedules the surrounding ops sensibly.
    flops = 2 * B * Cout * Cin * (Mp * M * N + Mp * N * Np_)
    bytes_accessed = 4 * (x.size + P.size + PT.size + B * Cout * Mp * Np_)

    return pl.pallas_call(
        _projection_kernel,
        out_shape=jax.ShapeDtypeStruct((B, Cout, Mp, Np_), jnp.float32),
        grid_spec=pltpu.PrefetchScalarGridSpec(
            num_scalar_prefetch=0,
            grid=(Cout,),
            in_specs=[
                # Full x every step (constant index_map -> no re-DMA per step).
                pl.BlockSpec((B, Cin, M, N), lambda i: (0, 0, 0, 0)),
                # Per-output-channel slices of the operators.
                pl.BlockSpec((1, Cin, Mp, M), lambda i: (i, 0, 0, 0)),
                pl.BlockSpec((1, Cin, N, Np_), lambda i: (i, 0, 0, 0)),
            ],
            out_specs=pl.BlockSpec((B, 1, Mp, Np_), lambda i: (0, i, 0, 0)),
        ),
        compiler_params=pltpu.CompilerParams(
            # Independent output channels: lets v7x shard steps across its 2 TCs.
            dimension_semantics=("parallel",),
        ),
        cost_estimate=pl.CostEstimate(
            flops=flops, transcendentals=0, bytes_accessed=bytes_accessed),
    )(x, P, PT)


def make_projection_params(input_shape, output_shape):
    """Mirror Projection.__init__: deterministic 'identity crop' operators."""
    Cin, M, N = input_shape
    Cout, Mp, Np_ = output_shape
    P = np.zeros([Cout, Cin, Mp, M], dtype=np.float32)
    PT = np.zeros([Cout, Cin, N, Np_], dtype=np.float32)
    k_max = min(M, N, Mp, Np_)
    for i in range(Cout):
        for j in range(Cin):
            for k in range(k_max):
                P[i, j, k, k] = 1.0
                PT[i, j, k, k] = 1.0
    return jnp.asarray(P), jnp.asarray(PT)


def projection_reference(x, P, PT):
    # out[b,i] = sum_j P[i,j] @ x[b,j] @ PT[i,j]
    t = jnp.einsum("ijpm,bjmn->bijpn", P, x)
    return jnp.einsum("bijpn,ijnq->bipq", t, PT)


if __name__ == "__main__":
    # Small shapes consistent with the module: Projection((4,16,16), (3,8,8))
    input_shape = (4, 16, 16)    # (Cin, M, N)
    output_shape = (3, 8, 8)     # (Cout, Mp, Np)
    B = 2

    key = jax.random.PRNGKey(0)
    x = jax.random.normal(key, (B,) + input_shape, dtype=jnp.float32)
    P, PT = make_projection_params(input_shape, output_shape)

    out = projection_forward(x, P, PT)
    out = jax.block_until_ready(out)

    ref = projection_reference(x, P, PT)
    np.testing.assert_allclose(np.asarray(out), np.asarray(ref), rtol=1e-5, atol=1e-5)

    print("KERNEL_OK")
</pallas_src>

<mosaic_0001>
module attributes {stable_mosaic.version = 11 : i64} {
  func.func @_projection_kernel(%arg0: i32, %arg1: memref<2x4x16x16xf32, #tpu.memory_space<vmem>>, %arg2: memref<1x4x8x16xf32, #tpu.memory_space<vmem>>, %arg3: memref<1x4x16x8xf32, #tpu.memory_space<vmem>>, %arg4: memref<2x1x8x8xf32, #tpu.memory_space<vmem>>) attributes {dimension_semantics = [#tpu.dimension_semantics<parallel>], iteration_bounds = array<i64: 3>, scalar_prefetch = 0 : i64, scratch_operands = 0 : i64, tpu.core_type = #tpu.core_type<tc>, window_params = [{pipeline_mode = #tpu.pipeline_mode<synchronous>, transform_indices = @transform_0, window_bounds = array<i64: 2, 4, 16, 16>}, {transform_indices = @transform_1, window_bounds = array<i64: 1, 4, 8, 16>}, {transform_indices = @transform_2, window_bounds = array<i64: 1, 4, 16, 8>}, {transform_indices = @transform_3, window_bounds = array<i64: 2, 1, 8, 8>}]} {
    %c0 = arith.constant 0 : index
    %c0_0 = arith.constant 0 : index
    %c0_1 = arith.constant 0 : index
    %c0_2 = arith.constant 0 : index
    %0 = vector.load %arg2[%c0, %c0_0, %c0_1, %c0_2] : memref<1x4x8x16xf32, #tpu.memory_space<vmem>>, vector<1x1x8x16xf32>
    %1 = vector.shape_cast %0 : vector<1x1x8x16xf32> to vector<8x16xf32>
    %c0_3 = arith.constant 0 : index
    %c0_4 = arith.constant 0 : index
    %c0_5 = arith.constant 0 : index
    %c0_6 = arith.constant 0 : index
    %2 = vector.load %arg1[%c0_3, %c0_4, %c0_5, %c0_6] : memref<2x4x16x16xf32, #tpu.memory_space<vmem>>, vector<1x1x16x16xf32>
    %3 = vector.shape_cast %2 : vector<1x1x16x16xf32> to vector<16x16xf32>
    %cst = arith.constant dense<0.000000e+00> : vector<8x16xf32>
    %4 = tpu.matmul %1, %3, %cst {dimension_numbers = #tpu.dot_dimension_numbers<[1], [0], [0], [1], [0, 0, 1, 1], [], []>} : vector<8x16xf32>, vector<16x16xf32>, vector<8x16xf32> -> vector<8x16xf32>
    %c0_7 = arith.constant 0 : index
    %c0_8 = arith.constant 0 : index
    %c0_9 = arith.constant 0 : index
    %c0_10 = arith.constant 0 : index
    %5 = vector.load %arg3[%c0_7, %c0_8, %c0_9, %c0_10] : memref<1x4x16x8xf32, #tpu.memory_space<vmem>>, vector<1x1x16x8xf32>
    %6 = vector.shape_cast %5 : vector<1x1x16x8xf32> to vector<16x8xf32>
    %cst_11 = arith.constant dense<0.000000e+00> : vector<8x8xf32>
    %7 = tpu.matmul %4, %6, %cst_11 {dimension_numbers = #tpu.dot_dimension_numbers<[1], [0], [0], [1], [0, 0, 1, 1], [], []>} : vector<8x16xf32>, vector<16x8xf32>, vector<8x8xf32> -> vector<8x8xf32>
    %c0_12 = arith.constant 0 : index
    %c1 = arith.constant 1 : index
    %c0_13 = arith.constant 0 : index
    %c0_14 = arith.constant 0 : index
    %8 = vector.load %arg2[%c0_12, %c1, %c0_13, %c0_14] : memref<1x4x8x16xf32, #tpu.memory_space<vmem>>, vector<1x1x8x16xf32>
    %9 = vector.shape_cast %8 : vector<1x1x8x16xf32> to vector<8x16xf32>
    %c0_15 = arith.constant 0 : index
    %c1_16 = arith.constant 1 : index
    %c0_17 = arith.constant 0 : index
    %c0_18 = arith.constant 0 : index
    %10 = vector.load %arg1[%c0_15, %c1_16, %c0_17, %c0_18] : memref<2x4x16x16xf32, #tpu.memory_space<vmem>>, vector<1x1x16x16xf32>
    %11 = vector.shape_cast %10 : vector<1x1x16x16xf32> to vector<16x16xf32>
    %cst_19 = arith.constant dense<0.000000e+00> : vector<8x16xf32>
    %12 = tpu.matmul %9, %11, %cst_19 {dimension_numbers = #tpu.dot_dimension_numbers<[1], [0], [0], [1], [0, 0, 1, 1], [], []>} : vector<8x16xf32>, vector<16x16xf32>, vector<8x16xf32> -> vector<8x16xf32>
    %c0_20 = arith.constant 0 : index
    %c1_21 = arith.constant 1 : index
    %c0_22 = arith.constant 0 : index
    %c0_23 = arith.constant 0 : index
    %13 = vector.load %arg3[%c0_20, %c1_21, %c0_22, %c0_23] : memref<1x4x16x8xf32, #tpu.memory_space<vmem>>, vector<1x1x16x8xf32>
    %14 = vector.shape_cast %13 : vector<1x1x16x8xf32> to vector<16x8xf32>
    %cst_24 = arith.constant dense<0.000000e+00> : vector<8x8xf32>
    %15 = tpu.matmul %12, %14, %cst_24 {dimension_numbers = #tpu.dot_dimension_numbers<[1], [0], [0], [1], [0, 0, 1, 1], [], []>} : vector<8x16xf32>, vector<16x8xf32>, vector<8x8xf32> -> vector<8x8xf32>
    %16 = arith.addf %7, %15 : vector<8x8xf32>
    %c0_25 = arith.constant 0 : index
    %c2 = arith.constant 2 : index
    %c0_26 = arith.constant 0 : index
    %c0_27 = arith.constant 0 : index
    %17 = vector.load %arg2[%c0_25, %c2, %c0_26, %c0_27] : memref<1x4x8x16xf32, #tpu.memory_space<vmem>>, vector<1x1x8x16xf32>
    %18 = vector.shape_cast %17 : vector<1x1x8x16xf32> to vector<8x16xf32>
    %c0_28 = arith.constant 0 : index
    %c2_29 = arith.constant 2 : index
    %c0_30 = arith.constant 0 : index
    %c0_31 = arith.constant 0 : index
    %19 = vector.load %arg1[%c0_28, %c2_29, %c0_30, %c0_31] : memref<2x4x16x16xf32, #tpu.memory_space<vmem>>, vector<1x1x16x16xf32>
    %20 = vector.shape_cast %19 : vector<1x1x16x16xf32> to vector<16x16xf32>
    %cst_32 = arith.constant dense<0.000000e+00> : vector<8x16xf32>
    %21 = tpu.matmul %18, %20, %cst_32 {dimension_numbers = #tpu.dot_dimension_numbers<[1], [0], [0], [1], [0, 0, 1, 1], [], []>} : vector<8x16xf32>, vector<16x16xf32>, vector<8x16xf32> -> vector<8x16xf32>
    %c0_33 = arith.constant 0 : index
    %c2_34 = arith.constant 2 : index
    %c0_35 = arith.constant 0 : index
    %c0_36 = arith.constant 0 : index
    %22 = vector.load %arg3[%c0_33, %c2_34, %c0_35, %c0_36] : memref<1x4x16x8xf32, #tpu.memory_space<vmem>>, vector<1x1x16x8xf32>
    %23 = vector.shape_cast %22 : vector<1x1x16x8xf32> to vector<16x8xf32>
    %cst_37 = arith.constant dense<0.000000e+00> : vector<8x8xf32>
    %24 = tpu.matmul %21, %23, %cst_37 {dimension_numbers = #tpu.dot_dimension_numbers<[1], [0], [0], [1], [0, 0, 1, 1], [], []>} : vector<8x16xf32>, vector<16x8xf32>, vector<8x8xf32> -> vector<8x8xf32>
    %25 = arith.addf %16, %24 : vector<8x8xf32>
    %c0_38 = arith.constant 0 : index
    %c3 = arith.constant 3 : index
    %c0_39 = arith.constant 0 : index
    %c0_40 = arith.constant 0 : index
    %26 = vector.load %arg2[%c0_38, %c3, %c0_39, %c0_40] : memref<1x4x8x16xf32, #tpu.memory_space<vmem>>, vector<1x1x8x16xf32>
    %27 = vector.shape_cast %26 : vector<1x1x8x16xf32> to vector<8x16xf32>
    %c0_41 = arith.constant 0 : index
    %c3_42 = arith.constant 3 : index
    %c0_43 = arith.constant 0 : index
    %c0_44 = arith.constant 0 : index
    %28 = vector.load %arg1[%c0_41, %c3_42, %c0_43, %c0_44] : memref<2x4x16x16xf32, #tpu.memory_space<vmem>>, vector<1x1x16x16xf32>
    %29 = vector.shape_cast %28 : vector<1x1x16x16xf32> to vector<16x16xf32>
    %cst_45 = arith.constant dense<0.000000e+00> : vector<8x16xf32>
    %30 = tpu.matmul %27, %29, %cst_45 {dimension_numbers = #tpu.dot_dimension_numbers<[1], [0], [0], [1], [0, 0, 1, 1], [], []>} : vector<8x16xf32>, vector<16x16xf32>, vector<8x16xf32> -> vector<8x16xf32>
    %c0_46 = arith.constant 0 : index
    %c3_47 = arith.constant 3 : index
    %c0_48 = arith.constant 0 : index
    %c0_49 = arith.constant 0 : index
    %31 = vector.load %arg3[%c0_46, %c3_47, %c0_48, %c0_49] : memref<1x4x16x8xf32, #tpu.memory_space<vmem>>, vector<1x1x16x8xf32>
    %32 = vector.shape_cast %31 : vector<1x1x16x8xf32> to vector<16x8xf32>
    %cst_50 = arith.constant dense<0.000000e+00> : vector<8x8xf32>
    %33 = tpu.matmul %30, %32, %cst_50 {dimension_numbers = #tpu.dot_dimension_numbers<[1], [0], [0], [1], [0, 0, 1, 1], [], []>} : vector<8x16xf32>, vector<16x8xf32>, vector<8x8xf32> -> vector<8x8xf32>
    %34 = arith.addf %25, %33 : vector<8x8xf32>
    %c0_51 = arith.constant 0 : index
    %c0_52 = arith.constant 0 : index
    %c0_53 = arith.constant 0 : index
    %c0_54 = arith.constant 0 : index
    %35 = vector.load %arg4[%c0_51, %c0_52, %c0_53, %c0_54] : memref<2x1x8x8xf32, #tpu.memory_space<vmem>>, vector<1x1x8x8xf32>
    %36 = vector.shape_cast %35 : vector<1x1x8x8xf32> to vector<8x8xf32>
    %37 = vector.shape_cast %34 : vector<8x8xf32> to vector<1x1x8x8xf32>
    tpu.vector_store %arg4[%c0_51, %c0_52, %c0_53, %c0_54], %37 {strides = array<i32>} : memref<2x1x8x8xf32, #tpu.memory_space<vmem>>, vector<1x1x8x8xf32>,
    %c0_55 = arith.constant 0 : index
    %c0_56 = arith.constant 0 : index
    %c0_57 = arith.constant 0 : index
    %c0_58 = arith.constant 0 : index
    %38 = vector.load %arg2[%c0_55, %c0_56, %c0_57, %c0_58] : memref<1x4x8x16xf32, #tpu.memory_space<vmem>>, vector<1x1x8x16xf32>
    %39 = vector.shape_cast %38 : vector<1x1x8x16xf32> to vector<8x16xf32>
    %c1_59 = arith.constant 1 : index
    %c0_60 = arith.constant 0 : index
    %c0_61 = arith.constant 0 : index
    %c0_62 = arith.constant 0 : index
    %40 = vector.load %arg1[%c1_59, %c0_60, %c0_61, %c0_62] : memref<2x4x16x16xf32, #tpu.memory_space<vmem>>, vector<1x1x16x16xf32>
    %41 = vector.shape_cast %40 : vector<1x1x16x16xf32> to vector<16x16xf32>
    %cst_63 = arith.constant dense<0.000000e+00> : vector<8x16xf32>
    %42 = tpu.matmul %39, %41, %cst_63 {dimension_numbers = #tpu.dot_dimension_numbers<[1], [0], [0], [1], [0, 0, 1, 1], [], []>} : vector<8x16xf32>, vector<16x16xf32>, vector<8x16xf32> -> vector<8x16xf32>
    %c0_64 = arith.constant 0 : index
    %c0_65 = arith.constant 0 : index
    %c0_66 = arith.constant 0 : index
    %c0_67 = arith.constant 0 : index
    %43 = vector.load %arg3[%c0_64, %c0_65, %c0_66, %c0_67] : memref<1x4x16x8xf32, #tpu.memory_space<vmem>>, vector<1x1x16x8xf32>
    %44 = vector.shape_cast %43 : vector<1x1x16x8xf32> to vector<16x8xf32>
    %cst_68 = arith.constant dense<0.000000e+00> : vector<8x8xf32>
    %45 = tpu.matmul %42, %44, %cst_68 {dimension_numbers = #tpu.dot_dimension_numbers<[1], [0], [0], [1], [0, 0, 1, 1], [], []>} : vector<8x16xf32>, vector<16x8xf32>, vector<8x8xf32> -> vector<8x8xf32>
    %c0_69 = arith.constant 0 : index
    %c1_70 = arith.constant 1 : index
    %c0_71 = arith.constant 0 : index
    %c0_72 = arith.constant 0 : index
    %46 = vector.load %arg2[%c0_69, %c1_70, %c0_71, %c0_72] : memref<1x4x8x16xf32, #tpu.memory_space<vmem>>, vector<1x1x8x16xf32>
    %47 = vector.shape_cast %46 : vector<1x1x8x16xf32> to vector<8x16xf32>
    %c1_73 = arith.constant 1 : index
    %c1_74 = arith.constant 1 : index
    %c0_75 = arith.constant 0 : index
    %c0_76 = arith.constant 0 : index
    %48 = vector.load %arg1[%c1_73, %c1_74, %c0_75, %c0_76] : memref<2x4x16x16xf32, #tpu.memory_space<vmem>>, vector<1x1x16x16xf32>
    %49 = vector.shape_cast %48 : vector<1x1x16x16xf32> to vector<16x16xf32>
    %cst_77 = arith.constant dense<0.000000e+00> : vector<8x16xf32>
    %50 = tpu.matmul %47, %49, %cst_77 {dimension_numbers = #tpu.dot_dimension_numbers<[1], [0], [0], [1], [0, 0, 1, 1], [], []>} : vector<8x16xf32>, vector<16x16xf32>, vector<8x16xf32> -> vector<8x16xf32>
    %c0_78 = arith.constant 0 : index
    %c1_79 = arith.constant 1 : index
    %c0_80 = arith.constant 0 : index
    %c0_81 = arith.constant 0 : index
    %51 = vector.load %arg3[%c0_78, %c1_79, %c0_80, %c0_81] : memref<1x4x16x8xf32, #tpu.memory_space<vmem>>, vector<1x1x16x8xf32>
    %52 = vector.shape_cast %51 : vector<1x1x16x8xf32> to vector<16x8xf32>
    %cst_82 = arith.constant dense<0.000000e+00> : vector<8x8xf32>
    %53 = tpu.matmul %50, %52, %cst_82 {dimension_numbers = #tpu.dot_dimension_numbers<[1], [0], [0], [1], [0, 0, 1, 1], [], []>} : vector<8x16xf32>, vector<16x8xf32>, vector<8x8xf32> -> vector<8x8xf32>
    %54 = arith.addf %45, %53 : vector<8x8xf32>
    %c0_83 = arith.constant 0 : index
    %c2_84 = arith.constant 2 : index
    %c0_85 = arith.constant 0 : index
    %c0_86 = arith.constant 0 : index
    %55 = vector.load %arg2[%c0_83, %c2_84, %c0_85, %c0_86] : memref<1x4x8x16xf32, #tpu.memory_space<vmem>>, vector<1x1x8x16xf32>
    %56 = vector.shape_cast %55 : vector<1x1x8x16xf32> to vector<8x16xf32>
    %c1_87 = arith.constant 1 : index
    %c2_88 = arith.constant 2 : index
    %c0_89 = arith.constant 0 : index
    %c0_90 = arith.constant 0 : index
    %57 = vector.load %arg1[%c1_87, %c2_88, %c0_89, %c0_90] : memref<2x4x16x16xf32, #tpu.memory_space<vmem>>, vector<1x1x16x16xf32>
    %58 = vector.shape_cast %57 : vector<1x1x16x16xf32> to vector<16x16xf32>
    %cst_91 = arith.constant dense<0.000000e+00> : vector<8x16xf32>
    %59 = tpu.matmul %56, %58, %cst_91 {dimension_numbers = #tpu.dot_dimension_numbers<[1], [0], [0], [1], [0, 0, 1, 1], [], []>} : vector<8x16xf32>, vector<16x16xf32>, vector<8x16xf32> -> vector<8x16xf32>
    %c0_92 = arith.constant 0 : index
    %c2_93 = arith.constant 2 : index
    %c0_94 = arith.constant 0 : index
    %c0_95 = arith.constant 0 : index
    %60 = vector.load %arg3[%c0_92, %c2_93, %c0_94, %c0_95] : memref<1x4x16x8xf32, #tpu.memory_space<vmem>>, vector<1x1x16x8xf32>
    %61 = vector.shape_cast %60 : vector<1x1x16x8xf32> to vector<16x8xf32>
    %cst_96 = arith.constant dense<0.000000e+00> : vector<8x8xf32>
    %62 = tpu.matmul %59, %61, %cst_96 {dimension_numbers = #tpu.dot_dimension_numbers<[1], [0], [0], [1], [0, 0, 1, 1], [], []>} : vector<8x16xf32>, vector<16x8xf32>, vector<8x8xf32> -> vector<8x8xf32>
    %63 = arith.addf %54, %62 : vector<8x8xf32>
    %c0_97 = arith.constant 0 : index
    %c3_98 = arith.constant 3 : index
    %c0_99 = arith.constant 0 : index
    %c0_100 = arith.constant 0 : index
    %64 = vector.load %arg2[%c0_97, %c3_98, %c0_99, %c0_100] : memref<1x4x8x16xf32, #tpu.memory_space<vmem>>, vector<1x1x8x16xf32>
    %65 = vector.shape_cast %64 : vector<1x1x8x16xf32> to vector<8x16xf32>
    %c1_101 = arith.constant 1 : index
    %c3_102 = arith.constant 3 : index
    %c0_103 = arith.constant 0 : index
    %c0_104 = arith.constant 0 : index
    %66 = vector.load %arg1[%c1_101, %c3_102, %c0_103, %c0_104] : memref<2x4x16x16xf32, #tpu.memory_space<vmem>>, vector<1x1x16x16xf32>
    %67 = vector.shape_cast %66 : vector<1x1x16x16xf32> to vector<16x16xf32>
    %cst_105 = arith.constant dense<0.000000e+00> : vector<8x16xf32>
    %68 = tpu.matmul %65, %67, %cst_105 {dimension_numbers = #tpu.dot_dimension_numbers<[1], [0], [0], [1], [0, 0, 1, 1], [], []>} : vector<8x16xf32>, vector<16x16xf32>, vector<8x16xf32> -> vector<8x16xf32>
    %c0_106 = arith.constant 0 : index
    %c3_107 = arith.constant 3 : index
    %c0_108 = arith.constant 0 : index
    %c0_109 = arith.constant 0 : index
    %69 = vector.load %arg3[%c0_106, %c3_107, %c0_108, %c0_109] : memref<1x4x16x8xf32, #tpu.memory_space<vmem>>, vector<1x1x16x8xf32>
    %70 = vector.shape_cast %69 : vector<1x1x16x8xf32> to vector<16x8xf32>
    %cst_110 = arith.constant dense<0.000000e+00> : vector<8x8xf32>
    %71 = tpu.matmul %68, %70, %cst_110 {dimension_numbers = #tpu.dot_dimension_numbers<[1], [0], [0], [1], [0, 0, 1, 1], [], []>} : vector<8x16xf32>, vector<16x8xf32>, vector<8x8xf32> -> vector<8x8xf32>
    %72 = arith.addf %63, %71 : vector<8x8xf32>
    %c1_111 = arith.constant 1 : index
    %c0_112 = arith.constant 0 : index
    %c0_113 = arith.constant 0 : index
    %c0_114 = arith.constant 0 : index
    %73 = vector.load %arg4[%c1_111, %c0_112, %c0_113, %c0_114] : memref<2x1x8x8xf32, #tpu.memory_space<vmem>>, vector<1x1x8x8xf32>
    %74 = vector.shape_cast %73 : vector<1x1x8x8xf32> to vector<8x8xf32>
    %75 = vector.shape_cast %72 : vector<8x8xf32> to vector<1x1x8x8xf32>
    tpu.vector_store %arg4[%c1_111, %c0_112, %c0_113, %c0_114], %75 {strides = array<i32>} : memref<2x1x8x8xf32, #tpu.memory_space<vmem>>, vector<1x1x8x8xf32>,
    return
  }
  func.func @transform_0(%arg0: i32) -> (i32, i32, i32, i32) {
    %c0_i32 = arith.constant 0 : i32
    %c0_i32_0 = arith.constant 0 : i32
    %c0_i32_1 = arith.constant 0 : i32
    %c0_i32_2 = arith.constant 0 : i32
    %c0_i32_3 = arith.constant 0 : i32
    return %c0_i32, %c0_i32_0, %c0_i32_1, %c0_i32_2 : i32, i32, i32, i32
  }
  func.func @transform_1(%arg0: i32) -> (i32, i32, i32, i32) {
    %c0_i32 = arith.constant 0 : i32
    %c0_i32_0 = arith.constant 0 : i32
    %c0_i32_1 = arith.constant 0 : i32
    %c0_i32_2 = arith.constant 0 : i32
    return %arg0, %c0_i32, %c0_i32_0, %c0_i32_1 : i32, i32, i32, i32
  }
  func.func @transform_2(%arg0: i32) -> (i32, i32, i32, i32) {
    %c0_i32 = arith.constant 0 : i32
    %c0_i32_0 = arith.constant 0 : i32
    %c0_i32_1 = arith.constant 0 : i32
    %c0_i32_2 = arith.constant 0 : i32
    return %arg0, %c0_i32, %c0_i32_0, %c0_i32_1 : i32, i32, i32, i32
  }
  func.func @transform_3(%arg0: i32) -> (i32, i32, i32, i32) {
    %c0_i32 = arith.constant 0 : i32
    %c0_i32_0 = arith.constant 0 : i32
    %c0_i32_1 = arith.constant 0 : i32
    %c0_i32_2 = arith.constant 0 : i32
    return %c0_i32, %arg0, %c0_i32_0, %c0_i32_1 : i32, i32, i32, i32
  }
}

</mosaic_0001>

<llo_original>
// kernel: tpu_custom_call.1
$region0: #{tpu_custom_call.1}
  #allocation0 [shape = 'u32[]', space=smem, size = 0x4, offset = 0x4, fixed_abs, tag = 'smem constant byte address 0x4 - core index']
  #allocation1 [shape = 'u32[144,128]{1,0:T(1,128)}', space=vmem, size = 0x12000, scoped, tag = 'internal scratch']
  %s0 = inlined_call_operand.vmem [shape: f32[2,4,16,16], index: 0, kind: input, shape index: {}]
  %s1 = inlined_call_operand.vmem [shape: f32[3,4,8,16], index: 1, kind: input, shape index: {}]
  %s2 = inlined_call_operand.vmem [shape: f32[3,4,16,8], index: 2, kind: input, shape index: {}]
  %s3 = inlined_call_operand.hbm [shape: f32[2,3,8,8], index: 3, kind: output, shape index: {}]
  %s4 = sld [smem:[#allocation0]]
  $region45: #{tpu_custom_call.1} parent=0
    _
  %s6 = ssub.s32 1, %s4
  %s7 = scalar_select 0, %s6, %s4
  $region1: #{tpu_custom_call.1} parent=0
    #allocation2 [shape = 'u8[16384]{0}', space=vmem, size = 0x4000, scoped, tag = 'output window, operand 0']
    #allocation3 [shape = 's32[2]{0}', space=sflag, size = 0x8, scoped, tag = 'scoped memory for tpu_custom_call.1']
    %8 = vsyncpa [#allocation3], 0
    %s9 = scalar_lea.sflag [#allocation3], 1
    %10 = vsyncpa %s9, 0
    loop: start=0, step=1, limit=5
    $region2: #{tpu_custom_call.1} parent=1 // loop_pre_header
      _
    $region3: #{tpu_custom_call.1} parent=1 // loop_header
      %s12 = sphi 0, %s16
      %p13 = scmp.ge.s32.totalorder %s12, 5
      %s20 = sphi 0, %s20
      %s22 = sphi 0, %s20
      %s23 = sphi 0, %s22
      %s37 = sphi 0, %s23
      %s43 = sphi 0, %s45
      %s46 = sphi 0, %s43
      %s47 = sphi 0, %s46
      %s63 = sphi 0, %s47
      %s69 = sphi 0, %s71
      %s72 = sphi 0, %s69
      %s73 = sphi 0, %s72
      %s89 = sphi 0, %s73
      %s95 = sphi 0, %s97
      %s98 = sphi 0, %s95
      %s99 = sphi 0, %s98
      %s115 = sphi 0, %s99
    $region4: #{tpu_custom_call.1} parent=1 // loop_header_branch
      %15 = sbr.rel (%p13) target = $region8
    $region5: #{tpu_custom_call.1} parent=1 // loop_body
      %s17 = ssub.s32 %s12, 1
      %s18 = ssub.s32 %s12, 2
      %s19 = sadd.s32 %s12, 1
      %s21 = sadd.s32 %s20, 1
      %p24 = scmp.eq.s32.totalorder %s12, 2
      %p25 = scmp.ne.s32.totalorder %s20, %s22
      %p26 = scmp.eq.s32.totalorder %s12, 0
      %p27 = por %p25, %p26
      %p28 = scmp.ne.s32.totalorder %s20, %s22
      %p29 = scmp.eq.s32.totalorder %s17, 2
      %p30 = por %p28, %p29
      %p31 = scmp.ne.s32.totalorder %s22, %s23
      %p32 = scmp.eq.s32.totalorder %s17, 0
      %p33 = por %p31, %p32
      %p34 = scmp.ne.s32.totalorder %s22, %s23
      %p35 = scmp.eq.s32.totalorder %s18, 2
      %p36 = por %p34, %p35
      %p38 = scmp.ne.s32.totalorder %s23, %s37
      %p39 = scmp.eq.s32.totalorder %s18, 0
      %p40 = por %p38, %p39
      %s41 = ssub.s32 %s12, %s19
      %p42 = scmp.eq.s32.totalorder %s41, 0
      %s44 = sadd.s32 %s43, 1
      %s45 = scalar_select %p42, %s43, %s44
      %p48 = pneg %p42
      %p49 = scmp.eq.s32.totalorder %s12, 2
      %p50 = por %p48, %p49
      %p51 = scmp.ne.s32.totalorder %s43, %s46
      %p52 = scmp.eq.s32.totalorder %s12, 0
      %p53 = por %p51, %p52
      %p54 = scmp.ne.s32.totalorder %s43, %s46
      %p55 = scmp.eq.s32.totalorder %s17, 2
      %p56 = por %p54, %p55
      %p57 = scmp.ne.s32.totalorder %s46, %s47
      %p58 = scmp.eq.s32.totalorder %s17, 0
      %p59 = por %p57, %p58
      %p60 = scmp.ne.s32.totalorder %s46, %s47
      %p61 = scmp.eq.s32.totalorder %s18, 2
      %p62 = por %p60, %p61
      %p64 = scmp.ne.s32.totalorder %s47, %s63
      %p65 = scmp.eq.s32.totalorder %s18, 0
      %p66 = por %p64, %p65
      %s67 = ssub.s32 %s12, %s19
      %p68 = scmp.eq.s32.totalorder %s67, 0
      %s70 = sadd.s32 %s69, 1
      %s71 = scalar_select %p68, %s69, %s70
      %p74 = pneg %p68
      %p75 = scmp.eq.s32.totalorder %s12, 2
      %p76 = por %p74, %p75
      %p77 = scmp.ne.s32.totalorder %s69, %s72
      %p78 = scmp.eq.s32.totalorder %s12, 0
      %p79 = por %p77, %p78
      %p80 = scmp.ne.s32.totalorder %s69, %s72
      %p81 = scmp.eq.s32.totalorder %s17, 2
      %p82 = por %p80, %p81
      %p83 = scmp.ne.s32.totalorder %s72, %s73
      %p84 = scmp.eq.s32.totalorder %s17, 0
      %p85 = por %p83, %p84
      %p86 = scmp.ne.s32.totalorder %s72, %s73
      %p87 = scmp.eq.s32.totalorder %s18, 2
      %p88 = por %p86, %p87
      %p90 = scmp.ne.s32.totalorder %s73, %s89
      %p91 = scmp.eq.s32.totalorder %s18, 0
      %p92 = por %p90, %p91
      %s93 = ssub.s32 %s12, %s19
      %p94 = scmp.eq.s32.totalorder %s93, 0
      %s96 = sadd.s32 %s95, 1
      %s97 = scalar_select %p94, %s95, %s96
      %p100 = pneg %p94
      %p101 = scmp.eq.s32.totalorder %s12, 2
      %p102 = por %p100, %p101
      %p103 = scmp.ne.s32.totalorder %s95, %s98
      %p104 = scmp.eq.s32.totalorder %s12, 0
      %p105 = por %p103, %p104
      %p106 = scmp.ne.s32.totalorder %s95, %s98
      %p107 = scmp.eq.s32.totalorder %s17, 2
      %p108 = por %p106, %p107
      %p109 = scmp.ne.s32.totalorder %s98, %s99
      %p110 = scmp.eq.s32.totalorder %s17, 0
      %p111 = por %p109, %p110
      %p112 = scmp.ne.s32.totalorder %s98, %s99
      %p113 = scmp.eq.s32.totalorder %s18, 2
      %p114 = por %p112, %p113
      %p116 = scmp.ne.s32.totalorder %s99, %s115
      %p117 = scmp.eq.s32.totalorder %s18, 0
      %p118 = por %p116, %p117
      %p119 = scmp.le.s32.totalorder 1, %s12
      %p120 = scmp.lt.s32.totalorder %s12, 4
      %p121 = pnand %p119, %p120
      %p122 = pneg %p121
      // Predicated region
      $region9: #{tpu_custom_call.1} parent=5 // pred_check
        _
      $region10: #{tpu_custom_call.1} parent=5 // pred_check_branch
        %124 = sbr.rel (%p121) target = $region12
      $region11: #{tpu_custom_call.1} parent=5 // pred_region
        %s125 = ssub.s32 %s12, 1
        // Predicated region
        $region13: #{tpu_custom_call.1} parent=11 // pred_check
          %p126 = pneg %p33
        $region14: #{tpu_custom_call.1} parent=11 // pred_check_branch
          %128 = sbr.rel (%p126) target = $region16
        $region15: #{tpu_custom_call.1} parent=11 // pred_region
          _
        $region16: #{tpu_custom_call.1} parent=11 // pred_fallthru
          _
      $region12: #{tpu_custom_call.1} parent=5 // pred_fallthru
        _
      %p129 = scmp.lt.s32.totalorder %s12, 3
      // Predicated region
      $region17: #{tpu_custom_call.1} parent=5 // pred_check
        %p130 = pneg %p129
      $region18: #{tpu_custom_call.1} parent=5 // pred_check_branch
        %132 = sbr.rel (%p130) target = $region20
      $region19: #{tpu_custom_call.1} parent=5 // pred_region
        // Predicated region
        $region21: #{tpu_custom_call.1} parent=19 // pred_check
          %p133 = pneg %p53
        $region22: #{tpu_custom_call.1} parent=19 // pred_check_branch
          %135 = sbr.rel (%p133) target = $region24
        $region23: #{tpu_custom_call.1} parent=19 // pred_region
          %p136 = scmp.lt.s32.totalorder %s12, 2
          %s137 = scalar_select %p136, %s12, 2
          %s138 = smul.addr %s137, 4
          %s139 = smul.addr %s138, 8
          %s140 = scalar_lea.vmem %s1, %s139
        $region24: #{tpu_custom_call.1} parent=19 // pred_fallthru
          _
        // Predicated region
        $region25: #{tpu_custom_call.1} parent=19 // pred_check
          %p141 = pneg %p79
        $region26: #{tpu_custom_call.1} parent=19 // pred_check_branch
          %143 = sbr.rel (%p141) target = $region28
        $region27: #{tpu_custom_call.1} parent=19 // pred_region
          %p144 = scmp.lt.s32.totalorder %s12, 2
          %s145 = scalar_select %p144, %s12, 2
          %s146 = smul.addr %s145, 8
          %s147 = smul.addr %s146, 8
          %s148 = scalar_lea.vmem %s2, %s147
        $region28: #{tpu_custom_call.1} parent=19 // pred_fallthru
          _
      $region20: #{tpu_custom_call.1} parent=5 // pred_fallthru
        _
      %p149 = scmp.le.s32.totalorder 1, %s12
      %p150 = scmp.lt.s32.totalorder %s12, 4
      %p151 = pnand %p149, %p150
      %p152 = pneg %p151
      // Predicated region
      $region29: #{tpu_custom_call.1} parent=5 // pred_check
        _
      $region30: #{tpu_custom_call.1} parent=5 // pred_check_branch
        %154 = sbr.rel (%p151) target = $region32
      $region31: #{tpu_custom_call.1} parent=5 // pred_region
        %s155 = ssub.s32 %s12, 1
        %p156 = pneg %p33
        %p157 = pneg %p30
        %p158 = scmp.lt.s32.totalorder %s17, 2
        %s159 = scalar_select %p158, %s17, 2
        %s160 = smul.addr %s159, 4
        %s161 = smul.addr %s160, 8
        %s162 = scalar_lea.vmem %s1, %s161
        %p163 = pneg %p59
        %p164 = pneg %p56
        %p165 = scmp.lt.s32.totalorder %s17, 2
        %s166 = scalar_select %p165, %s17, 2
        %s167 = smul.addr %s166, 8
        %s168 = smul.addr %s167, 8
        %s169 = scalar_lea.vmem %s2, %s168
        %p170 = pneg %p85
        %p171 = pneg %p82
        %p172 = pneg %p111
        %p173 = pneg %p108
        %s174 = sand.u32 %s98, 1
        %s175 = scalar_lea.sflag [#allocation3], %s174
        %s176 = sand.u32 %s98, 1
        %s177 = smul.addr %s176, 16
        %s178 = scalar_lea.vmem [#allocation2], %s177
        %p179 = scmp.lt.s32.totalorder %s17, 2
        %s180 = scalar_select %p179, %s17, 2
        %s181 = smul.addr %s180, 4
        %s182 = smul.addr %s181, 8
        %s183 = scalar_lea.vmem %s1, %s182
        %p184 = scmp.lt.s32.totalorder %s17, 2
        %s185 = scalar_select %p184, %s17, 2
        %s186 = smul.addr %s185, 8
        %s187 = smul.addr %s186, 8
        %s188 = scalar_lea.vmem %s2, %s187
        %v189 = vld [vmem:[%s183] sm:$0xff]
        %v190 = vld [vmem:[%s0] sm:$0xff]
        %v191 = vld [vmem:[%s0 + $0x8] sm:$0xff]
        %vm192 = vcmask 130048
        %v194 = vsel %vm192, %v189, 0
        %196 = vmatprep.subr.mxu0 0.0
        %197 = vmatpush1.msra.mxu0 0.0
        %198 = vmatprep.subr.mxu0 0.0
        %199 = vmatpush1.msra.mxu0 0.0
        %200 = vmatprep.subr.mxu0 0.0
        %201 = vmatpush1.msra.mxu0 0.0
        %202 = vmatprep.subr.mxu0 0.0
        %203 = vmatpush1.msra.mxu0 0.0
        %204 = vmatprep.subr.mxu0 0.0
        %205 = vmatpush1.msra.mxu0 0.0
        %206 = vmatprep.subr.mxu0 0.0
        %207 = vmatpush1.msra.mxu0 0.0
        %208 = vmatprep.subr.mxu0 0.0
        %209 = vmatpush1.msra.mxu0 0.0
        %210 = vmatprep.subr.mxu0 0.0
        %211 = vmatpush1.msra.mxu0 0.0
        %212 = vmatprep.subr.mxu0 0.0
        %213 = vmatpush1.msra.mxu0 0.0
        %214 = vmatprep.subr.mxu0 0.0
        %215 = vmatpush1.msra.mxu0 0.0
        %216 = vmatprep.subr.mxu0 0.0
        %217 = vmatpush1.msra.mxu0 0.0
        %218 = vmatprep.subr.mxu0 0.0
        %219 = vmatpush1.msra.mxu0 0.0
        %220 = vmatprep.subr.mxu0 0.0
        %221 = vmatpush1.msra.mxu0 0.0
        %222 = vmatprep.subr.mxu0 0.0
        %223 = vmatpush1.msra.mxu0 0.0
        %224 = vmatprep.subr.mxu0 0.0
        %225 = vmatpush1.msra.mxu0 %v191
        %226 = vmatprep.subr.mxu0 0.0
        %227 = vmatpush1.msra.mxu0 %v190
        %228 = vmatprep.subr.mxu0 0.0
        %229 = vmatpush2.msra.mxu0 0.0
        %230 = vmatprep.subr.mxu0 0.0
        %231 = vmatpush2.msra.mxu0 0.0
        %232 = vmatprep.subr.mxu0 0.0
        %233 = vmatpush2.msra.mxu0 0.0
        %234 = vmatprep.subr.mxu0 0.0
        %235 = vmatpush2.msra.mxu0 0.0
        %236 = vmatprep.subr.mxu0 0.0
        %237 = vmatpush2.msra.mxu0 0.0
        %238 = vmatprep.subr.mxu0 0.0
        %239 = vmatpush2.msra.mxu0 0.0
        %240 = vmatprep.subr.mxu0 0.0
        %241 = vmatpush2.msra.mxu0 0.0
        %242 = vmatprep.subr.mxu0 0.0
        %243 = vmatpush2.msra.mxu0 0.0
        %244 = vmatprep.subr.mxu0 0.0
        %245 = vmatpush2.msra.mxu0 0.0
        %246 = vmatprep.subr.mxu0 0.0
        %247 = vmatpush2.msra.mxu0 0.0
        %248 = vmatprep.subr.mxu0 0.0
        %249 = vmatpush2.msra.mxu0 0.0
        %250 = vmatprep.subr.mxu0 0.0
        %251 = vmatpush2.msra.mxu0 0.0
        %252 = vmatprep.subr.mxu0 0.0
        %253 = vmatpush2.msra.mxu0 0.0
        %254 = vmatprep.subr.mxu0 0.0
        %255 = vmatpush2.msra.mxu0 0.0
        %256 = vmatprep.subr.mxu0 0.0
        %257 = vmatpush2.msra.mxu0 0.0
        %258 = vmatprep.subr.mxu0 0.0
        %259 = vmatpush2.msra.mxu0 0.0
        %260 = vmatprep.mubr.f32.mxu0 0.0
        %261 = vmatmul.mubr.f32.gmra.mxu0 %v194
        %v262 = vpop.f32.mrf.mxu0
        %v263 = vadd.f32 0.0, %v262
        %v264 = vpop.f32.mrf.mxu0
        %265 = vdwg.mxu0
        %v266 = vld [vmem:[%s188] sm:$0xff]
        %v267 = vld [vmem:[%s188 + $0x8] sm:$0xff]
        %s268 = scalar_lea.vmem %s183, 8
        %v269 = vld [vmem:[%s268] sm:$0xff]
        %s270 = scalar_lea.vmem %s0, 16
        %v271 = vld [vmem:[%s270] sm:$0xff]
        %v272 = vld [vmem:[%s270 + $0x8] sm:$0xff]
        %v274 = vsel %vm192, %v269, 0
        %276 = vmatprep.subr.mxu0 0.0
        %277 = vmatpush1.msra.mxu0 0.0
        %278 = vmatprep.subr.mxu0 0.0
        %279 = vmatpush1.msra.mxu0 0.0
        %280 = vmatprep.subr.mxu0 0.0
        %281 = vmatpush1.msra.mxu0 0.0
        %282 = vmatprep.subr.mxu0 0.0
        %283 = vmatpush1.msra.mxu0 0.0
        %284 = vmatprep.subr.mxu0 0.0
        %285 = vmatpush1.msra.mxu0 0.0
        %286 = vmatprep.subr.mxu0 0.0
        %287 = vmatpush1.msra.mxu0 0.0
        %288 = vmatprep.subr.mxu0 0.0
        %289 = vmatpush1.msra.mxu0 0.0
        %290 = vmatprep.subr.mxu0 0.0
        %291 = vmatpush1.msra.mxu0 0.0
        %292 = vmatprep.subr.mxu0 0.0
        %293 = vmatpush1.msra.mxu0 0.0
        %294 = vmatprep.subr.mxu0 0.0
        %295 = vmatpush1.msra.mxu0 0.0
        %296 = vmatprep.subr.mxu0 0.0
        %297 = vmatpush1.msra.mxu0 0.0
        %298 = vmatprep.subr.mxu0 0.0
        %299 = vmatpush1.msra.mxu0 0.0
        %300 = vmatprep.subr.mxu0 0.0
        %301 = vmatpush1.msra.mxu0 0.0
        %302 = vmatprep.subr.mxu0 0.0
        %303 = vmatpush1.msra.mxu0 0.0
        %304 = vmatprep.subr.mxu0 0.0
        %305 = vmatpush1.msra.mxu0 %v272
        %306 = vmatprep.subr.mxu0 0.0
        %307 = vmatpush1.msra.mxu0 %v271
        %308 = vmatprep.subr.mxu0 0.0
        %309 = vmatpush2.msra.mxu0 0.0
        %310 = vmatprep.subr.mxu0 0.0
        %311 = vmatpush2.msra.mxu0 0.0
        %312 = vmatprep.subr.mxu0 0.0
        %313 = vmatpush2.msra.mxu0 0.0
        %314 = vmatprep.subr.mxu0 0.0
        %315 = vmatpush2.msra.mxu0 0.0
        %316 = vmatprep.subr.mxu0 0.0
        %317 = vmatpush2.msra.mxu0 0.0
        %318 = vmatprep.subr.mxu0 0.0
        %319 = vmatpush2.msra.mxu0 0.0
        %320 = vmatprep.subr.mxu0 0.0
        %321 = vmatpush2.msra.mxu0 0.0
        %322 = vmatprep.subr.mxu0 0.0
        %323 = vmatpush2.msra.mxu0 0.0
        %324 = vmatprep.subr.mxu0 0.0
        %325 = vmatpush2.msra.mxu0 0.0
        %326 = vmatprep.subr.mxu0 0.0
        %327 = vmatpush2.msra.mxu0 0.0
        %328 = vmatprep.subr.mxu0 0.0
        %329 = vmatpush2.msra.mxu0 0.0
        %330 = vmatprep.subr.mxu0 0.0
        %331 = vmatpush2.msra.mxu0 0.0
        %332 = vmatprep.subr.mxu0 0.0
        %333 = vmatpush2.msra.mxu0 0.0
        %334 = vmatprep.subr.mxu0 0.0
        %335 = vmatpush2.msra.mxu0 0.0
        %336 = vmatprep.subr.mxu0 0.0
        %337 = vmatpush2.msra.mxu0 0.0
        %338 = vmatprep.subr.mxu0 0.0
        %339 = vmatpush2.msra.mxu0 0.0
        %340 = vmatprep.mubr.f32.mxu0 0.0
        %341 = vmatmul.mubr.f32.gmra.mxu0 %v274
        %v342 = vpop.f32.mrf.mxu0
        %v343 = vadd.f32 0.0, %v342
        %v344 = vpop.f32.mrf.mxu0
        %345 = vdwg.mxu0
        %s346 = scalar_lea.vmem %s188, 16
        %v347 = vld [vmem:[%s346] sm:$0xff]
        %v348 = vld [vmem:[%s346 + $0x8] sm:$0xff]
        %v350 = vsel %vm192, %v343, 0
        %352 = vmatprep.subr.mxu0 0.0
        %353 = vmatpush1.msra.mxu0 0.0
        %354 = vmatprep.subr.mxu0 0.0
        %355 = vmatpush1.msra.mxu0 0.0
        %356 = vmatprep.subr.mxu0 0.0
        %357 = vmatpush1.msra.mxu0 0.0
        %358 = vmatprep.subr.mxu0 0.0
        %359 = vmatpush1.msra.mxu0 0.0
        %360 = vmatprep.subr.mxu0 0.0
        %361 = vmatpush1.msra.mxu0 0.0
        %362 = vmatprep.subr.mxu0 0.0
        %363 = vmatpush1.msra.mxu0 0.0
        %364 = vmatprep.subr.mxu0 0.0
        %365 = vmatpush1.msra.mxu0 0.0
        %366 = vmatprep.subr.mxu0 0.0
        %367 = vmatpush1.msra.mxu0 0.0
        %368 = vmatprep.subr.mxu0 0.0
        %369 = vmatpush1.msra.mxu0 0.0
        %370 = vmatprep.subr.mxu0 0.0
        %371 = vmatpush1.msra.mxu0 0.0
        %372 = vmatprep.subr.mxu0 0.0
        %373 = vmatpush1.msra.mxu0 0.0
        %374 = vmatprep.subr.mxu0 0.0
        %375 = vmatpush1.msra.mxu0 0.0
        %376 = vmatprep.subr.mxu0 0.0
        %377 = vmatpush1.msra.mxu0 0.0
        %378 = vmatprep.subr.mxu0 0.0
        %379 = vmatpush1.msra.mxu0 0.0
        %380 = vmatprep.subr.mxu0 0.0
        %381 = vmatpush1.msra.mxu0 %v348
        %382 = vmatprep.subr.mxu0 0.0
        %383 = vmatpush1.msra.mxu0 %v347
        %384 = vmatprep.subr.mxu0 0.0
        %385 = vmatpush2.msra.mxu0 0.0
        %386 = vmatprep.subr.mxu0 0.0
        %387 = vmatpush2.msra.mxu0 0.0
        %388 = vmatprep.subr.mxu0 0.0
        %389 = vmatpush2.msra.mxu0 0.0
        %390 = vmatprep.subr.mxu0 0.0
        %391 = vmatpush2.msra.mxu0 0.0
        %392 = vmatprep.subr.mxu0 0.0
        %393 = vmatpush2.msra.mxu0 0.0
        %394 = vmatprep.subr.mxu0 0.0
        %395 = vmatpush2.msra.mxu0 0.0
        %396 = vmatprep.subr.mxu0 0.0
        %397 = vmatpush2.msra.mxu0 0.0
        %398 = vmatprep.subr.mxu0 0.0
        %399 = vmatpush2.msra.mxu0 0.0
        %400 = vmatprep.subr.mxu0 0.0
        %401 = vmatpush2.msra.mxu0 0.0
        %402 = vmatprep.subr.mxu0 0.0
        %403 = vmatpush2.msra.mxu0 0.0
        %404 = vmatprep.subr.mxu0 0.0
        %405 = vmatpush2.msra.mxu0 0.0
        %406 = vmatprep.subr.mxu0 0.0
        %407 = vmatpush2.msra.mxu0 0.0
        %408 = vmatprep.subr.mxu0 0.0
        %409 = vmatpush2.msra.mxu0 0.0
        %410 = vmatprep.subr.mxu0 0.0
        %411 = vmatpush2.msra.mxu0 0.0
        %412 = vmatprep.subr.mxu0 0.0
        %413 = vmatpush2.msra.mxu0 0.0
        %414 = vmatprep.subr.mxu0 0.0
        %415 = vmatpush2.msra.mxu0 0.0
        %416 = vmatprep.mubr.f32.mxu0 0.0
        %417 = vmatmul.mubr.f32.gmra.mxu0 %v350
        %v418 = vpop.f32.mrf.mxu0
        %v419 = vadd.f32 0.0, %v418
        %v420 = vpop.f32.mrf.mxu0
        %421 = vdwg.mxu0
        %v423 = vsel %vm192, %v263, 0
        %425 = vmatprep.subr.mxu0 0.0
        %426 = vmatpush1.msra.mxu0 0.0
        %427 = vmatprep.subr.mxu0 0.0
        %428 = vmatpush1.msra.mxu0 0.0
        %429 = vmatprep.subr.mxu0 0.0
        %430 = vmatpush1.msra.mxu0 0.0
        %431 = vmatprep.subr.mxu0 0.0
        %432 = vmatpush1.msra.mxu0 0.0
        %433 = vmatprep.subr.mxu0 0.0
        %434 = vmatpush1.msra.mxu0 0.0
        %435 = vmatprep.subr.mxu0 0.0
        %436 = vmatpush1.msra.mxu0 0.0
        %437 = vmatprep.subr.mxu0 0.0
        %438 = vmatpush1.msra.mxu0 0.0
        %439 = vmatprep.subr.mxu0 0.0
        %440 = vmatpush1.msra.mxu0 0.0
        %441 = vmatprep.subr.mxu0 0.0
        %442 = vmatpush1.msra.mxu0 0.0
        %443 = vmatprep.subr.mxu0 0.0
        %444 = vmatpush1.msra.mxu0 0.0
        %445 = vmatprep.subr.mxu0 0.0
        %446 = vmatpush1.msra.mxu0 0.0
        %447 = vmatprep.subr.mxu0 0.0
        %448 = vmatpush1.msra.mxu0 0.0
        %449 = vmatprep.subr.mxu0 0.0
        %450 = vmatpush1.msra.mxu0 0.0
        %451 = vmatprep.subr.mxu0 0.0
        %452 = vmatpush1.msra.mxu0 0.0
        %453 = vmatprep.subr.mxu0 0.0
        %454 = vmatpush1.msra.mxu0 %v267
        %455 = vmatprep.subr.mxu0 0.0
        %456 = vmatpush1.msra.mxu0 %v266
        %457 = vmatprep.subr.mxu0 0.0
        %458 = vmatpush2.msra.mxu0 0.0
        %459 = vmatprep.subr.mxu0 0.0
        %460 = vmatpush2.msra.mxu0 0.0
        %461 = vmatprep.subr.mxu0 0.0
        %462 = vmatpush2.msra.mxu0 0.0
        %463 = vmatprep.subr.mxu0 0.0
        %464 = vmatpush2.msra.mxu0 0.0
        %465 = vmatprep.subr.mxu0 0.0
        %466 = vmatpush2.msra.mxu0 0.0
        %467 = vmatprep.subr.mxu0 0.0
        %468 = vmatpush2.msra.mxu0 0.0
        %469 = vmatprep.subr.mxu0 0.0
        %470 = vmatpush2.msra.mxu0 0.0
        %471 = vmatprep.subr.mxu0 0.0
        %472 = vmatpush2.msra.mxu0 0.0
        %473 = vmatprep.subr.mxu0 0.0
        %474 = vmatpush2.msra.mxu0 0.0
        %475 = vmatprep.subr.mxu0 0.0
        %476 = vmatpush2.msra.mxu0 0.0
        %477 = vmatprep.subr.mxu0 0.0
        %478 = vmatpush2.msra.mxu0 0.0
        %479 = vmatprep.subr.mxu0 0.0
        %480 = vmatpush2.msra.mxu0 0.0
        %481 = vmatprep.subr.mxu0 0.0
        %482 = vmatpush2.msra.mxu0 0.0
        %483 = vmatprep.subr.mxu0 0.0
        %484 = vmatpush2.msra.mxu0 0.0
        %485 = vmatprep.subr.mxu0 0.0
        %486 = vmatpush2.msra.mxu0 0.0
        %487 = vmatprep.subr.mxu0 0.0
        %488 = vmatpush2.msra.mxu0 0.0
        %489 = vmatprep.mubr.f32.mxu0 0.0
        %490 = vmatmul.mubr.f32.gmra.mxu0 %v423
        %v491 = vpop.f32.mrf.mxu0
        %v492 = vadd.f32 %v419, %v491
        %v493 = vpop.f32.mrf.mxu0
        %494 = vdwg.mxu0
        %s495 = scalar_lea.vmem %s183, 16
        %v496 = vld [vmem:[%s495] sm:$0xff]
        %s497 = scalar_lea.vmem %s0, 32
        %v498 = vld [vmem:[%s497] sm:$0xff]
        %v499 = vld [vmem:[%s497 + $0x8] sm:$0xff]
        %v501 = vsel %vm192, %v496, 0
        %503 = vmatprep.subr.mxu0 0.0
        %504 = vmatpush1.msra.mxu0 0.0
        %505 = vmatprep.subr.mxu0 0.0
        %506 = vmatpush1.msra.mxu0 0.0
        %507 = vmatprep.subr.mxu0 0.0
        %508 = vmatpush1.msra.mxu0 0.0
        %509 = vmatprep.subr.mxu0 0.0
        %510 = vmatpush1.msra.mxu0 0.0
        %511 = vmatprep.subr.mxu0 0.0
        %512 = vmatpush1.msra.mxu0 0.0
        %513 = vmatprep.subr.mxu0 0.0
        %514 = vmatpush1.msra.mxu0 0.0
        %515 = vmatprep.subr.mxu0 0.0
        %516 = vmatpush1.msra.mxu0 0.0
        %517 = vmatprep.subr.mxu0 0.0
        %518 = vmatpush1.msra.mxu0 0.0
        %519 = vmatprep.subr.mxu0 0.0
        %520 = vmatpush1.msra.mxu0 0.0
        %521 = vmatprep.subr.mxu0 0.0
        %522 = vmatpush1.msra.mxu0 0.0
        %523 = vmatprep.subr.mxu0 0.0
        %524 = vmatpush1.msra.mxu0 0.0
        %525 = vmatprep.subr.mxu0 0.0
        %526 = vmatpush1.msra.mxu0 0.0
        %527 = vmatprep.subr.mxu0 0.0
        %528 = vmatpush1.msra.mxu0 0.0
        %529 = vmatprep.subr.mxu0 0.0
        %530 = vmatpush1.msra.mxu0 0.0
        %531 = vmatprep.subr.mxu0 0.0
        %532 = vmatpush1.msra.mxu0 %v499
        %533 = vmatprep.subr.mxu0 0.0
        %534 = vmatpush1.msra.mxu0 %v498
        %535 = vmatprep.subr.mxu0 0.0
        %536 = vmatpush2.msra.mxu0 0.0
        %537 = vmatprep.subr.mxu0 0.0
        %538 = vmatpush2.msra.mxu0 0.0
        %539 = vmatprep.subr.mxu0 0.0
        %540 = vmatpush2.msra.mxu0 0.0
        %541 = vmatprep.subr.mxu0 0.0
        %542 = vmatpush2.msra.mxu0 0.0
        %543 = vmatprep.subr.mxu0 0.0
        %544 = vmatpush2.msra.mxu0 0.0
        %545 = vmatprep.subr.mxu0 0.0
        %546 = vmatpush2.msra.mxu0 0.0
        %547 = vmatprep.subr.mxu0 0.0
        %548 = vmatpush2.msra.mxu0 0.0
        %549 = vmatprep.subr.mxu0 0.0
        %550 = vmatpush2.msra.mxu0 0.0
        %551 = vmatprep.subr.mxu0 0.0
        %552 = vmatpush2.msra.mxu0 0.0
        %553 = vmatprep.subr.mxu0 0.0
        %554 = vmatpush2.msra.mxu0 0.0
        %555 = vmatprep.subr.mxu0 0.0
        %556 = vmatpush2.msra.mxu0 0.0
        %557 = vmatprep.subr.mxu0 0.0
        %558 = vmatpush2.msra.mxu0 0.0
        %559 = vmatprep.subr.mxu0 0.0
        %560 = vmatpush2.msra.mxu0 0.0
        %561 = vmatprep.subr.mxu0 0.0
        %562 = vmatpush2.msra.mxu0 0.0
        %563 = vmatprep.subr.mxu0 0.0
        %564 = vmatpush2.msra.mxu0 0.0
        %565 = vmatprep.subr.mxu0 0.0
        %566 = vmatpush2.msra.mxu0 0.0
        %567 = vmatprep.mubr.f32.mxu0 0.0
        %568 = vmatmul.mubr.f32.gmra.mxu0 %v501
        %v569 = vpop.f32.mrf.mxu0
        %v570 = vadd.f32 0.0, %v569
        %v571 = vpop.f32.mrf.mxu0
        %572 = vdwg.mxu0
        %s573 = scalar_lea.vmem %s188, 32
        %v574 = vld [vmem:[%s573] sm:$0xff]
        %v575 = vld [vmem:[%s573 + $0x8] sm:$0xff]
        %v577 = vsel %vm192, %v570, 0
        %579 = vmatprep.subr.mxu0 0.0
        %580 = vmatpush1.msra.mxu0 0.0
        %581 = vmatprep.subr.mxu0 0.0
        %582 = vmatpush1.msra.mxu0 0.0
        %583 = vmatprep.subr.mxu0 0.0
        %584 = vmatpush1.msra.mxu0 0.0
        %585 = vmatprep.subr.mxu0 0.0
        %586 = vmatpush1.msra.mxu0 0.0
        %587 = vmatprep.subr.mxu0 0.0
        %588 = vmatpush1.msra.mxu0 0.0
        %589 = vmatprep.subr.mxu0 0.0
        %590 = vmatpush1.msra.mxu0 0.0
        %591 = vmatprep.subr.mxu0 0.0
        %592 = vmatpush1.msra.mxu0 0.0
        %593 = vmatprep.subr.mxu0 0.0
        %594 = vmatpush1.msra.mxu0 0.0
        %595 = vmatprep.subr.mxu0 0.0
        %596 = vmatpush1.msra.mxu0 0.0
        %597 = vmatprep.subr.mxu0 0.0
        %598 = vmatpush1.msra.mxu0 0.0
        %599 = vmatprep.subr.mxu0 0.0
        %600 = vmatpush1.msra.mxu0 0.0
        %601 = vmatprep.subr.mxu0 0.0
        %602 = vmatpush1.msra.mxu0 0.0
        %603 = vmatprep.subr.mxu0 0.0
        %604 = vmatpush1.msra.mxu0 0.0
        %605 = vmatprep.subr.mxu0 0.0
        %606 = vmatpush1.msra.mxu0 0.0
        %607 = vmatprep.subr.mxu0 0.0
        %608 = vmatpush1.msra.mxu0 %v575
        %609 = vmatprep.subr.mxu0 0.0
        %610 = vmatpush1.msra.mxu0 %v574
        %611 = vmatprep.subr.mxu0 0.0
        %612 = vmatpush2.msra.mxu0 0.0
        %613 = vmatprep.subr.mxu0 0.0
        %614 = vmatpush2.msra.mxu0 0.0
        %615 = vmatprep.subr.mxu0 0.0
        %616 = vmatpush2.msra.mxu0 0.0
        %617 = vmatprep.subr.mxu0 0.0
        %618 = vmatpush2.msra.mxu0 0.0
        %619 = vmatprep.subr.mxu0 0.0
        %620 = vmatpush2.msra.mxu0 0.0
        %621 = vmatprep.subr.mxu0 0.0
        %622 = vmatpush2.msra.mxu0 0.0
        %623 = vmatprep.subr.mxu0 0.0
        %624 = vmatpush2.msra.mxu0 0.0
        %625 = vmatprep.subr.mxu0 0.0
        %626 = vmatpush2.msra.mxu0 0.0
        %627 = vmatprep.subr.mxu0 0.0
        %628 = vmatpush2.msra.mxu0 0.0
        %629 = vmatprep.subr.mxu0 0.0
        %630 = vmatpush2.msra.mxu0 0.0
        %631 = vmatprep.subr.mxu0 0.0
        %632 = vmatpush2.msra.mxu0 0.0
        %633 = vmatprep.subr.mxu0 0.0
        %634 = vmatpush2.msra.mxu0 0.0
        %635 = vmatprep.subr.mxu0 0.0
        %636 = vmatpush2.msra.mxu0 0.0
        %637 = vmatprep.subr.mxu0 0.0
        %638 = vmatpush2.msra.mxu0 0.0
        %639 = vmatprep.subr.mxu0 0.0
        %640 = vmatpush2.msra.mxu0 0.0
        %641 = vmatprep.subr.mxu0 0.0
        %642 = vmatpush2.msra.mxu0 0.0
        %643 = vmatprep.mubr.f32.mxu0 0.0
        %644 = vmatmul.mubr.f32.gmra.mxu0 %v577
        %v645 = vpop.f32.mrf.mxu0
        %v646 = vadd.f32 0.0, %v645
        %v647 = vpop.f32.mrf.mxu0
        %648 = vdwg.mxu0
        %v649 = vadd.f32 %v492, %v646
        %s650 = scalar_lea.vmem %s183, 24
        %v651 = vld [vmem:[%s650] sm:$0xff]
        %s652 = scalar_lea.vmem %s0, 48
        %v653 = vld [vmem:[%s652] sm:$0xff]
        %v654 = vld [vmem:[%s652 + $0x8] sm:$0xff]
        %v656 = vsel %vm192, %v651, 0
        %658 = vmatprep.subr.mxu0 0.0
        %659 = vmatpush1.msra.mxu0 0.0
        %660 = vmatprep.subr.mxu0 0.0
        %661 = vmatpush1.msra.mxu0 0.0
        %662 = vmatprep.subr.mxu0 0.0
        %663 = vmatpush1.msra.mxu0 0.0
        %664 = vmatprep.subr.mxu0 0.0
        %665 = vmatpush1.msra.mxu0 0.0
        %666 = vmatprep.subr.mxu0 0.0
        %667 = vmatpush1.msra.mxu0 0.0
        %668 = vmatprep.subr.mxu0 0.0
        %669 = vmatpush1.msra.mxu0 0.0
        %670 = vmatprep.subr.mxu0 0.0
        %671 = vmatpush1.msra.mxu0 0.0
        %672 = vmatprep.subr.mxu0 0.0
        %673 = vmatpush1.msra.mxu0 0.0
        %674 = vmatprep.subr.mxu0 0.0
        %675 = vmatpush1.msra.mxu0 0.0
        %676 = vmatprep.subr.mxu0 0.0
        %677 = vmatpush1.msra.mxu0 0.0
        %678 = vmatprep.subr.mxu0 0.0
        %679 = vmatpush1.msra.mxu0 0.0
        %680 = vmatprep.subr.mxu0 0.0
        %681 = vmatpush1.msra.mxu0 0.0
        %682 = vmatprep.subr.mxu0 0.0
        %683 = vmatpush1.msra.mxu0 0.0
        %684 = vmatprep.subr.mxu0 0.0
        %685 = vmatpush1.msra.mxu0 0.0
        %686 = vmatprep.subr.mxu0 0.0
        %687 = vmatpush1.msra.mxu0 %v654
        %688 = vmatprep.subr.mxu0 0.0
        %689 = vmatpush1.msra.mxu0 %v653
        %690 = vmatprep.subr.mxu0 0.0
        %691 = vmatpush2.msra.mxu0 0.0
        %692 = vmatprep.subr.mxu0 0.0
        %693 = vmatpush2.msra.mxu0 0.0
        %694 = vmatprep.subr.mxu0 0.0
        %695 = vmatpush2.msra.mxu0 0.0
        %696 = vmatprep.subr.mxu0 0.0
        %697 = vmatpush2.msra.mxu0 0.0
        %698 = vmatprep.subr.mxu0 0.0
        %699 = vmatpush2.msra.mxu0 0.0
        %700 = vmatprep.subr.mxu0 0.0
        %701 = vmatpush2.msra.mxu0 0.0
        %702 = vmatprep.subr.mxu0 0.0
        %703 = vmatpush2.msra.mxu0 0.0
        %704 = vmatprep.subr.mxu0 0.0
        %705 = vmatpush2.msra.mxu0 0.0
        %706 = vmatprep.subr.mxu0 0.0
        %707 = vmatpush2.msra.mxu0 0.0
        %708 = vmatprep.subr.mxu0 0.0
        %709 = vmatpush2.msra.mxu0 0.0
        %710 = vmatprep.subr.mxu0 0.0
        %711 = vmatpush2.msra.mxu0 0.0
        %712 = vmatprep.subr.mxu0 0.0
        %713 = vmatpush2.msra.mxu0 0.0
        %714 = vmatprep.subr.mxu0 0.0
        %715 = vmatpush2.msra.mxu0 0.0
        %716 = vmatprep.subr.mxu0 0.0
        %717 = vmatpush2.msra.mxu0 0.0
        %718 = vmatprep.subr.mxu0 0.0
        %719 = vmatpush2.msra.mxu0 0.0
        %720 = vmatprep.subr.mxu0 0.0
        %721 = vmatpush2.msra.mxu0 0.0
        %722 = vmatprep.mubr.f32.mxu0 0.0
        %723 = vmatmul.mubr.f32.gmra.mxu0 %v656
        %v724 = vpop.f32.mrf.mxu0
        %v725 = vadd.f32 0.0, %v724
        %v726 = vpop.f32.mrf.mxu0
        %727 = vdwg.mxu0
        %s728 = scalar_lea.vmem %s188, 48
        %v729 = vld [vmem:[%s728] sm:$0xff]
        %v730 = vld [vmem:[%s728 + $0x8] sm:$0xff]
        %v732 = vsel %vm192, %v725, 0
        %734 = vmatprep.subr.mxu0 0.0
        %735 = vmatpush1.msra.mxu0 0.0
        %736 = vmatprep.subr.mxu0 0.0
        %737 = vmatpush1.msra.mxu0 0.0
        %738 = vmatprep.subr.mxu0 0.0
        %739 = vmatpush1.msra.mxu0 0.0
        %740 = vmatprep.subr.mxu0 0.0
        %741 = vmatpush1.msra.mxu0 0.0
        %742 = vmatprep.subr.mxu0 0.0
        %743 = vmatpush1.msra.mxu0 0.0
        %744 = vmatprep.subr.mxu0 0.0
        %745 = vmatpush1.msra.mxu0 0.0
        %746 = vmatprep.subr.mxu0 0.0
        %747 = vmatpush1.msra.mxu0 0.0
        %748 = vmatprep.subr.mxu0 0.0
        %749 = vmatpush1.msra.mxu0 0.0
        %750 = vmatprep.subr.mxu0 0.0
        %751 = vmatpush1.msra.mxu0 0.0
        %752 = vmatprep.subr.mxu0 0.0
        %753 = vmatpush1.msra.mxu0 0.0
        %754 = vmatprep.subr.mxu0 0.0
        %755 = vmatpush1.msra.mxu0 0.0
        %756 = vmatprep.subr.mxu0 0.0
        %757 = vmatpush1.msra.mxu0 0.0
        %758 = vmatprep.subr.mxu0 0.0
        %759 = vmatpush1.msra.mxu0 0.0
        %760 = vmatprep.subr.mxu0 0.0
        %761 = vmatpush1.msra.mxu0 0.0
        %762 = vmatprep.subr.mxu0 0.0
        %763 = vmatpush1.msra.mxu0 %v730
        %764 = vmatprep.subr.mxu0 0.0
        %765 = vmatpush1.msra.mxu0 %v729
        %766 = vmatprep.subr.mxu0 0.0
        %767 = vmatpush2.msra.mxu0 0.0
        %768 = vmatprep.subr.mxu0 0.0
        %769 = vmatpush2.msra.mxu0 0.0
        %770 = vmatprep.subr.mxu0 0.0
        %771 = vmatpush2.msra.mxu0 0.0
        %772 = vmatprep.subr.mxu0 0.0
        %773 = vmatpush2.msra.mxu0 0.0
        %774 = vmatprep.subr.mxu0 0.0
        %775 = vmatpush2.msra.mxu0 0.0
        %776 = vmatprep.subr.mxu0 0.0
        %777 = vmatpush2.msra.mxu0 0.0
        %778 = vmatprep.subr.mxu0 0.0
        %779 = vmatpush2.msra.mxu0 0.0
        %780 = vmatprep.subr.mxu0 0.0
        %781 = vmatpush2.msra.mxu0 0.0
        %782 = vmatprep.subr.mxu0 0.0
        %783 = vmatpush2.msra.mxu0 0.0
        %784 = vmatprep.subr.mxu0 0.0
        %785 = vmatpush2.msra.mxu0 0.0
        %786 = vmatprep.subr.mxu0 0.0
        %787 = vmatpush2.msra.mxu0 0.0
        %788 = vmatprep.subr.mxu0 0.0
        %789 = vmatpush2.msra.mxu0 0.0
        %790 = vmatprep.subr.mxu0 0.0
        %791 = vmatpush2.msra.mxu0 0.0
        %792 = vmatprep.subr.mxu0 0.0
        %793 = vmatpush2.msra.mxu0 0.0
        %794 = vmatprep.subr.mxu0 0.0
        %795 = vmatpush2.msra.mxu0 0.0
        %796 = vmatprep.subr.mxu0 0.0
        %797 = vmatpush2.msra.mxu0 0.0
        %798 = vmatprep.mubr.f32.mxu0 0.0
        %799 = vmatmul.mubr.f32.gmra.mxu0 %v732
        %v800 = vpop.f32.mrf.mxu0
        %v801 = vadd.f32 0.0, %v800
        %v802 = vpop.f32.mrf.mxu0
        %803 = vdwg.mxu0
        %v804 = vadd.f32 %v649, %v801
        %vm805 = vcmask 64512
        %806 = vst.msk [vmem:[%s178] sm:$0xff] %vm805, %v804
        %v807 = vld [vmem:[%s183] sm:$0xff]
        %s808 = scalar_lea.vmem %s0, 64
        %v809 = vld [vmem:[%s808] sm:$0xff]
        %v810 = vld [vmem:[%s808 + $0x8] sm:$0xff]
        %v812 = vsel %vm192, %v807, 0
        %814 = vmatprep.subr.mxu0 0.0
        %815 = vmatpush1.msra.mxu0 0.0
        %816 = vmatprep.subr.mxu0 0.0
        %817 = vmatpush1.msra.mxu0 0.0
        %818 = vmatprep.subr.mxu0 0.0
        %819 = vmatpush1.msra.mxu0 0.0
        %820 = vmatprep.subr.mxu0 0.0
        %821 = vmatpush1.msra.mxu0 0.0
        %822 = vmatprep.subr.mxu0 0.0
        %823 = vmatpush1.msra.mxu0 0.0
        %824 = vmatprep.subr.mxu0 0.0
        %825 = vmatpush1.msra.mxu0 0.0
        %826 = vmatprep.subr.mxu0 0.0
        %827 = vmatpush1.msra.mxu0 0.0
        %828 = vmatprep.subr.mxu0 0.0
        %829 = vmatpush1.msra.mxu0 0.0
        %830 = vmatprep.subr.mxu0 0.0
        %831 = vmatpush1.msra.mxu0 0.0
        %832 = vmatprep.subr.mxu0 0.0
        %833 = vmatpush1.msra.mxu0 0.0
        %834 = vmatprep.subr.mxu0 0.0
        %835 = vmatpush1.msra.mxu0 0.0
        %836 = vmatprep.subr.mxu0 0.0
        %837 = vmatpush1.msra.mxu0 0.0
        %838 = vmatprep.subr.mxu0 0.0
        %839 = vmatpush1.msra.mxu0 0.0
        %840 = vmatprep.subr.mxu0 0.0
        %841 = vmatpush1.msra.mxu0 0.0
        %842 = vmatprep.subr.mxu0 0.0
        %843 = vmatpush1.msra.mxu0 %v810
        %844 = vmatprep.subr.mxu0 0.0
        %845 = vmatpush1.msra.mxu0 %v809
        %846 = vmatprep.subr.mxu0 0.0
        %847 = vmatpush2.msra.mxu0 0.0
        %848 = vmatprep.subr.mxu0 0.0
        %849 = vmatpush2.msra.mxu0 0.0
        %850 = vmatprep.subr.mxu0 0.0
        %851 = vmatpush2.msra.mxu0 0.0
        %852 = vmatprep.subr.mxu0 0.0
        %853 = vmatpush2.msra.mxu0 0.0
        %854 = vmatprep.subr.mxu0 0.0
        %855 = vmatpush2.msra.mxu0 0.0
        %856 = vmatprep.subr.mxu0 0.0
        %857 = vmatpush2.msra.mxu0 0.0
        %858 = vmatprep.subr.mxu0 0.0
        %859 = vmatpush2.msra.mxu0 0.0
        %860 = vmatprep.subr.mxu0 0.0
        %861 = vmatpush2.msra.mxu0 0.0
        %862 = vmatprep.subr.mxu0 0.0
        %863 = vmatpush2.msra.mxu0 0.0
        %864 = vmatprep.subr.mxu0 0.0
        %865 = vmatpush2.msra.mxu0 0.0
        %866 = vmatprep.subr.mxu0 0.0
        %867 = vmatpush2.msra.mxu0 0.0
        %868 = vmatprep.subr.mxu0 0.0
        %869 = vmatpush2.msra.mxu0 0.0
        %870 = vmatprep.subr.mxu0 0.0
        %871 = vmatpush2.msra.mxu0 0.0
        %872 = vmatprep.subr.mxu0 0.0
        %873 = vmatpush2.msra.mxu0 0.0
        %874 = vmatprep.subr.mxu0 0.0
        %875 = vmatpush2.msra.mxu0 0.0
        %876 = vmatprep.subr.mxu0 0.0
        %877 = vmatpush2.msra.mxu0 0.0
        %878 = vmatprep.mubr.f32.mxu0 0.0
        %879 = vmatmul.mubr.f32.gmra.mxu0 %v812
        %v880 = vpop.f32.mrf.mxu0
        %v881 = vadd.f32 0.0, %v880
        %v882 = vpop.f32.mrf.mxu0
        %883 = vdwg.mxu0
        %v884 = vld [vmem:[%s188] sm:$0xff]
        %v885 = vld [vmem:[%s188 + $0x8] sm:$0xff]
        %v886 = vld [vmem:[%s268] sm:$0xff]
        %s887 = scalar_lea.vmem %s0, 80
        %v888 = vld [vmem:[%s887] sm:$0xff]
        %v889 = vld [vmem:[%s887 + $0x8] sm:$0xff]
        %v891 = vsel %vm192, %v886, 0
        %893 = vmatprep.subr.mxu0 0.0
        %894 = vmatpush1.msra.mxu0 0.0
        %895 = vmatprep.subr.mxu0 0.0
        %896 = vmatpush1.msra.mxu0 0.0
        %897 = vmatprep.subr.mxu0 0.0
        %898 = vmatpush1.msra.mxu0 0.0
        %899 = vmatprep.subr.mxu0 0.0
        %900 = vmatpush1.msra.mxu0 0.0
        %901 = vmatprep.subr.mxu0 0.0
        %902 = vmatpush1.msra.mxu0 0.0
        %903 = vmatprep.subr.mxu0 0.0
        %904 = vmatpush1.msra.mxu0 0.0
        %905 = vmatprep.subr.mxu0 0.0
        %906 = vmatpush1.msra.mxu0 0.0
        %907 = vmatprep.subr.mxu0 0.0
        %908 = vmatpush1.msra.mxu0 0.0
        %909 = vmatprep.subr.mxu0 0.0
        %910 = vmatpush1.msra.mxu0 0.0
        %911 = vmatprep.subr.mxu0 0.0
        %912 = vmatpush1.msra.mxu0 0.0
        %913 = vmatprep.subr.mxu0 0.0
        %914 = vmatpush1.msra.mxu0 0.0
        %915 = vmatprep.subr.mxu0 0.0
        %916 = vmatpush1.msra.mxu0 0.0
        %917 = vmatprep.subr.mxu0 0.0
        %918 = vmatpush1.msra.mxu0 0.0
        %919 = vmatprep.subr.mxu0 0.0
        %920 = vmatpush1.msra.mxu0 0.0
        %921 = vmatprep.subr.mxu0 0.0
        %922 = vmatpush1.msra.mxu0 %v889
        %923 = vmatprep.subr.mxu0 0.0
        %924 = vmatpush1.msra.mxu0 %v888
        %925 = vmatprep.subr.mxu0 0.0
        %926 = vmatpush2.msra.mxu0 0.0
        %927 = vmatprep.subr.mxu0 0.0
        %928 = vmatpush2.msra.mxu0 0.0
        %929 = vmatprep.subr.mxu0 0.0
        %930 = vmatpush2.msra.mxu0 0.0
        %931 = vmatprep.subr.mxu0 0.0
        %932 = vmatpush2.msra.mxu0 0.0
        %933 = vmatprep.subr.mxu0 0.0
        %934 = vmatpush2.msra.mxu0 0.0
        %935 = vmatprep.subr.mxu0 0.0
        %936 = vmatpush2.msra.mxu0 0.0
        %937 = vmatprep.subr.mxu0 0.0
        %938 = vmatpush2.msra.mxu0 0.0
        %939 = vmatprep.subr.mxu0 0.0
        %940 = vmatpush2.msra.mxu0 0.0
        %941 = vmatprep.subr.mxu0 0.0
        %942 = vmatpush2.msra.mxu0 0.0
        %943 = vmatprep.subr.mxu0 0.0
        %944 = vmatpush2.msra.mxu0 0.0
        %945 = vmatprep.subr.mxu0 0.0
        %946 = vmatpush2.msra.mxu0 0.0
        %947 = vmatprep.subr.mxu0 0.0
        %948 = vmatpush2.msra.mxu0 0.0
        %949 = vmatprep.subr.mxu0 0.0
        %950 = vmatpush2.msra.mxu0 0.0
        %951 = vmatprep.subr.mxu0 0.0
        %952 = vmatpush2.msra.mxu0 0.0
        %953 = vmatprep.subr.mxu0 0.0
        %954 = vmatpush2.msra.mxu0 0.0
        %955 = vmatprep.subr.mxu0 0.0
        %956 = vmatpush2.msra.mxu0 0.0
        %957 = vmatprep.mubr.f32.mxu0 0.0
        %958 = vmatmul.mubr.f32.gmra.mxu0 %v891
        %v959 = vpop.f32.mrf.mxu0
        %v960 = vadd.f32 0.0, %v959
        %v961 = vpop.f32.mrf.mxu0
        %962 = vdwg.mxu0
        %v963 = vld [vmem:[%s346] sm:$0xff]
        %v964 = vld [vmem:[%s346 + $0x8] sm:$0xff]
        %v966 = vsel %vm192, %v960, 0
        %968 = vmatprep.subr.mxu0 0.0
        %969 = vmatpush1.msra.mxu0 0.0
        %970 = vmatprep.subr.mxu0 0.0
        %971 = vmatpush1.msra.mxu0 0.0
        %972 = vmatprep.subr.mxu0 0.0
        %973 = vmatpush1.msra.mxu0 0.0
        %974 = vmatprep.subr.mxu0 0.0
        %975 = vmatpush1.msra.mxu0 0.0
        %976 = vmatprep.subr.mxu0 0.0
        %977 = vmatpush1.msra.mxu0 0.0
        %978 = vmatprep.subr.mxu0 0.0
        %979 = vmatpush1.msra.mxu0 0.0
        %980 = vmatprep.subr.mxu0 0.0
        %981 = vmatpush1.msra.mxu0 0.0
        %982 = vmatprep.subr.mxu0 0.0
        %983 = vmatpush1.msra.mxu0 0.0
        %984 = vmatprep.subr.mxu0 0.0
        %985 = vmatpush1.msra.mxu0 0.0
        %986 = vmatprep.subr.mxu0 0.0
        %987 = vmatpush1.msra.mxu0 0.0
        %988 = vmatprep.subr.mxu0 0.0
        %989 = vmatpush1.msra.mxu0 0.0
        %990 = vmatprep.subr.mxu0 0.0
        %991 = vmatpush1.msra.mxu0 0.0
        %992 = vmatprep.subr.mxu0 0.0
        %993 = vmatpush1.msra.mxu0 0.0
        %994 = vmatprep.subr.mxu0 0.0
        %995 = vmatpush1.msra.mxu0 0.0
        %996 = vmatprep.subr.mxu0 0.0
        %997 = vmatpush1.msra.mxu0 %v964
        %998 = vmatprep.subr.mxu0 0.0
        %999 = vmatpush1.msra.mxu0 %v963
        %1000 = vmatprep.subr.mxu0 0.0
        %1001 = vmatpush2.msra.mxu0 0.0
        %1002 = vmatprep.subr.mxu0 0.0
        %1003 = vmatpush2.msra.mxu0 0.0
        %1004 = vmatprep.subr.mxu0 0.0
        %1005 = vmatpush2.msra.mxu0 0.0
        %1006 = vmatprep.subr.mxu0 0.0
        %1007 = vmatpush2.msra.mxu0 0.0
        %1008 = vmatprep.subr.mxu0 0.0
        %1009 = vmatpush2.msra.mxu0 0.0
        %1010 = vmatprep.subr.mxu0 0.0
        %1011 = vmatpush2.msra.mxu0 0.0
        %1012 = vmatprep.subr.mxu0 0.0
        %1013 = vmatpush2.msra.mxu0 0.0
        %1014 = vmatprep.subr.mxu0 0.0
        %1015 = vmatpush2.msra.mxu0 0.0
        %1016 = vmatprep.subr.mxu0 0.0
        %1017 = vmatpush2.msra.mxu0 0.0
        %1018 = vmatprep.subr.mxu0 0.0
        %1019 = vmatpush2.msra.mxu0 0.0
        %1020 = vmatprep.subr.mxu0 0.0
        %1021 = vmatpush2.msra.mxu0 0.0
        %1022 = vmatprep.subr.mxu0 0.0
        %1023 = vmatpush2.msra.mxu0 0.0
        %1024 = vmatprep.subr.mxu0 0.0
        %1025 = vmatpush2.msra.mxu0 0.0
        %1026 = vmatprep.subr.mxu0 0.0
        %1027 = vmatpush2.msra.mxu0 0.0
        %1028 = vmatprep.subr.mxu0 0.0
        %1029 = vmatpush2.msra.mxu0 0.0
        %1030 = vmatprep.subr.mxu0 0.0
        %1031 = vmatpush2.msra.mxu0 0.0
        %1032 = vmatprep.mubr.f32.mxu0 0.0
        %1033 = vmatmul.mubr.f32.gmra.mxu0 %v966
        %v1034 = vpop.f32.mrf.mxu0
        %v1035 = vadd.f32 0.0, %v1034
        %v1036 = vpop.f32.mrf.mxu0
        %1037 = vdwg.mxu0
        %v1039 = vsel %vm192, %v881, 0
        %1041 = vmatprep.subr.mxu0 0.0
        %1042 = vmatpush1.msra.mxu0 0.0
        %1043 = vmatprep.subr.mxu0 0.0
        %1044 = vmatpush1.msra.mxu0 0.0
        %1045 = vmatprep.subr.mxu0 0.0
        %1046 = vmatpush1.msra.mxu0 0.0
        %1047 = vmatprep.subr.mxu0 0.0
        %1048 = vmatpush1.msra.mxu0 0.0
        %1049 = vmatprep.subr.mxu0 0.0
        %1050 = vmatpush1.msra.mxu0 0.0
        %1051 = vmatprep.subr.mxu0 0.0
        %1052 = vmatpush1.msra.mxu0 0.0
        %1053 = vmatprep.subr.mxu0 0.0
        %1054 = vmatpush1.msra.mxu0 0.0
        %1055 = vmatprep.subr.mxu0 0.0
        %1056 = vmatpush1.msra.mxu0 0.0
        %1057 = vmatprep.subr.mxu0 0.0
        %1058 = vmatpush1.msra.mxu0 0.0
        %1059 = vmatprep.subr.mxu0 0.0
        %1060 = vmatpush1.msra.mxu0 0.0
        %1061 = vmatprep.subr.mxu0 0.0
        %1062 = vmatpush1.msra.mxu0 0.0
        %1063 = vmatprep.subr.mxu0 0.0
        %1064 = vmatpush1.msra.mxu0 0.0
        %1065 = vmatprep.subr.mxu0 0.0
        %1066 = vmatpush1.msra.mxu0 0.0
        %1067 = vmatprep.subr.mxu0 0.0
        %1068 = vmatpush1.msra.mxu0 0.0
        %1069 = vmatprep.subr.mxu0 0.0
        %1070 = vmatpush1.msra.mxu0 %v885
        %1071 = vmatprep.subr.mxu0 0.0
        %1072 = vmatpush1.msra.mxu0 %v884
        %1073 = vmatprep.subr.mxu0 0.0
        %1074 = vmatpush2.msra.mxu0 0.0
        %1075 = vmatprep.subr.mxu0 0.0
        %1076 = vmatpush2.msra.mxu0 0.0
        %1077 = vmatprep.subr.mxu0 0.0
        %1078 = vmatpush2.msra.mxu0 0.0
        %1079 = vmatprep.subr.mxu0 0.0
        %1080 = vmatpush2.msra.mxu0 0.0
        %1081 = vmatprep.subr.mxu0 0.0
        %1082 = vmatpush2.msra.mxu0 0.0
        %1083 = vmatprep.subr.mxu0 0.0
        %1084 = vmatpush2.msra.mxu0 0.0
        %1085 = vmatprep.subr.mxu0 0.0
        %1086 = vmatpush2.msra.mxu0 0.0
        %1087 = vmatprep.subr.mxu0 0.0
        %1088 = vmatpush2.msra.mxu0 0.0
        %1089 = vmatprep.subr.mxu0 0.0
        %1090 = vmatpush2.msra.mxu0 0.0
        %1091 = vmatprep.subr.mxu0 0.0
        %1092 = vmatpush2.msra.mxu0 0.0
        %1093 = vmatprep.subr.mxu0 0.0
        %1094 = vmatpush2.msra.mxu0 0.0
        %1095 = vmatprep.subr.mxu0 0.0
        %1096 = vmatpush2.msra.mxu0 0.0
        %1097 = vmatprep.subr.mxu0 0.0
        %1098 = vmatpush2.msra.mxu0 0.0
        %1099 = vmatprep.subr.mxu0 0.0
        %1100 = vmatpush2.msra.mxu0 0.0
        %1101 = vmatprep.subr.mxu0 0.0
        %1102 = vmatpush2.msra.mxu0 0.0
        %1103 = vmatprep.subr.mxu0 0.0
        %1104 = vmatpush2.msra.mxu0 0.0
        %1105 = vmatprep.mubr.f32.mxu0 0.0
        %1106 = vmatmul.mubr.f32.gmra.mxu0 %v1039
        %v1107 = vpop.f32.mrf.mxu0
        %v1108 = vadd.f32 %v1035, %v1107
        %v1109 = vpop.f32.mrf.mxu0
        %1110 = vdwg.mxu0
        %v1111 = vld [vmem:[%s495] sm:$0xff]
        %s1112 = scalar_lea.vmem %s0, 96
        %v1113 = vld [vmem:[%s1112] sm:$0xff]
        %v1114 = vld [vmem:[%s1112 + $0x8] sm:$0xff]
        %v1116 = vsel %vm192, %v1111, 0
        %1118 = vmatprep.subr.mxu0 0.0
        %1119 = vmatpush1.msra.mxu0 0.0
        %1120 = vmatprep.subr.mxu0 0.0
        %1121 = vmatpush1.msra.mxu0 0.0
        %1122 = vmatprep.subr.mxu0 0.0
        %1123 = vmatpush1.msra.mxu0 0.0
        %1124 = vmatprep.subr.mxu0 0.0
        %1125 = vmatpush1.msra.mxu0 0.0
        %1126 = vmatprep.subr.mxu0 0.0
        %1127 = vmatpush1.msra.mxu0 0.0
        %1128 = vmatprep.subr.mxu0 0.0
        %1129 = vmatpush1.msra.mxu0 0.0
        %1130 = vmatprep.subr.mxu0 0.0
        %1131 = vmatpush1.msra.mxu0 0.0
        %1132 = vmatprep.subr.mxu0 0.0
        %1133 = vmatpush1.msra.mxu0 0.0
        %1134 = vmatprep.subr.mxu0 0.0
        %1135 = vmatpush1.msra.mxu0 0.0
        %1136 = vmatprep.subr.mxu0 0.0
        %1137 = vmatpush1.msra.mxu0 0.0
        %1138 = vmatprep.subr.mxu0 0.0
        %1139 = vmatpush1.msra.mxu0 0.0
        %1140 = vmatprep.subr.mxu0 0.0
        %1141 = vmatpush1.msra.mxu0 0.0
        %1142 = vmatprep.subr.mxu0 0.0
        %1143 = vmatpush1.msra.mxu0 0.0
        %1144 = vmatprep.subr.mxu0 0.0
        %1145 = vmatpush1.msra.mxu0 0.0
        %1146 = vmatprep.subr.mxu0 0.0
        %1147 = vmatpush1.msra.mxu0 %v1114
        %1148 = vmatprep.subr.mxu0 0.0
        %1149 = vmatpush1.msra.mxu0 %v1113
        %1150 = vmatprep.subr.mxu0 0.0
        %1151 = vmatpush2.msra.mxu0 0.0
        %1152 = vmatprep.subr.mxu0 0.0
        %1153 = vmatpush2.msra.mxu0 0.0
        %1154 = vmatprep.subr.mxu0 0.0
        %1155 = vmatpush2.msra.mxu0 0.0
        %1156 = vmatprep.subr.mxu0 0.0
        %1157 = vmatpush2.msra.mxu0 0.0
        %1158 = vmatprep.subr.mxu0 0.0
        %1159 = vmatpush2.msra.mxu0 0.0
        %1160 = vmatprep.subr.mxu0 0.0
        %1161 = vmatpush2.msra.mxu0 0.0
        %1162 = vmatprep.subr.mxu0 0.0
        %1163 = vmatpush2.msra.mxu0 0.0
        %1164 = vmatprep.subr.mxu0 0.0
        %1165 = vmatpush2.msra.mxu0 0.0
        %1166 = vmatprep.subr.mxu0 0.0
        %1167 = vmatpush2.msra.mxu0 0.0
        %1168 = vmatprep.subr.mxu0 0.0
        %1169 = vmatpush2.msra.mxu0 0.0
        %1170 = vmatprep.subr.mxu0 0.0
        %1171 = vmatpush2.msra.mxu0 0.0
        %1172 = vmatprep.subr.mxu0 0.0
        %1173 = vmatpush2.msra.mxu0 0.0
        %1174 = vmatprep.subr.mxu0 0.0
        %1175 = vmatpush2.msra.mxu0 0.0
        %1176 = vmatprep.subr.mxu0 0.0
        %1177 = vmatpush2.msra.mxu0 0.0
        %1178 = vmatprep.subr.mxu0 0.0
        %1179 = vmatpush2.msra.mxu0 0.0
        %1180 = vmatprep.subr.mxu0 0.0
        %1181 = vmatpush2.msra.mxu0 0.0
        %1182 = vmatprep.mubr.f32.mxu0 0.0
        %1183 = vmatmul.mubr.f32.gmra.mxu0 %v1116
        %v1184 = vpop.f32.mrf.mxu0
        %v1185 = vadd.f32 0.0, %v1184
        %v1186 = vpop.f32.mrf.mxu0
        %1187 = vdwg.mxu0
        %v1188 = vld [vmem:[%s573] sm:$0xff]
        %v1189 = vld [vmem:[%s573 + $0x8] sm:$0xff]
        %v1191 = vsel %vm192, %v1185, 0
        %1193 = vmatprep.subr.mxu0 0.0
        %1194 = vmatpush1.msra.mxu0 0.0
        %1195 = vmatprep.subr.mxu0 0.0
        %1196 = vmatpush1.msra.mxu0 0.0
        %1197 = vmatprep.subr.mxu0 0.0
        %1198 = vmatpush1.msra.mxu0 0.0
        %1199 = vmatprep.subr.mxu0 0.0
        %1200 = vmatpush1.msra.mxu0 0.0
        %1201 = vmatprep.subr.mxu0 0.0
        %1202 = vmatpush1.msra.mxu0 0.0
        %1203 = vmatprep.subr.mxu0 0.0
        %1204 = vmatpush1.msra.mxu0 0.0
        %1205 = vmatprep.subr.mxu0 0.0
        %1206 = vmatpush1.msra.mxu0 0.0
        %1207 = vmatprep.subr.mxu0 0.0
        %1208 = vmatpush1.msra.mxu0 0.0
        %1209 = vmatprep.subr.mxu0 0.0
        %1210 = vmatpush1.msra.mxu0 0.0
        %1211 = vmatprep.subr.mxu0 0.0
        %1212 = vmatpush1.msra.mxu0 0.0
        %1213 = vmatprep.subr.mxu0 0.0
        %1214 = vmatpush1.msra.mxu0 0.0
        %1215 = vmatprep.subr.mxu0 0.0
        %1216 = vmatpush1.msra.mxu0 0.0
        %1217 = vmatprep.subr.mxu0 0.0
        %1218 = vmatpush1.msra.mxu0 0.0
        %1219 = vmatprep.subr.mxu0 0.0
        %1220 = vmatpush1.msra.mxu0 0.0
        %1221 = vmatprep.subr.mxu0 0.0
        %1222 = vmatpush1.msra.mxu0 %v1189
        %1223 = vmatprep.subr.mxu0 0.0
        %1224 = vmatpush1.msra.mxu0 %v1188
        %1225 = vmatprep.subr.mxu0 0.0
        %1226 = vmatpush2.msra.mxu0 0.0
        %1227 = vmatprep.subr.mxu0 0.0
        %1228 = vmatpush2.msra.mxu0 0.0
        %1229 = vmatprep.subr.mxu0 0.0
        %1230 = vmatpush2.msra.mxu0 0.0
        %1231 = vmatprep.subr.mxu0 0.0
        %1232 = vmatpush2.msra.mxu0 0.0
        %1233 = vmatprep.subr.mxu0 0.0
        %1234 = vmatpush2.msra.mxu0 0.0
        %1235 = vmatprep.subr.mxu0 0.0
        %1236 = vmatpush2.msra.mxu0 0.0
        %1237 = vmatprep.subr.mxu0 0.0
        %1238 = vmatpush2.msra.mxu0 0.0
        %1239 = vmatprep.subr.mxu0 0.0
        %1240 = vmatpush2.msra.mxu0 0.0
        %1241 = vmatprep.subr.mxu0 0.0
        %1242 = vmatpush2.msra.mxu0 0.0
        %1243 = vmatprep.subr.mxu0 0.0
        %1244 = vmatpush2.msra.mxu0 0.0
        %1245 = vmatprep.subr.mxu0 0.0
        %1246 = vmatpush2.msra.mxu0 0.0
        %1247 = vmatprep.subr.mxu0 0.0
        %1248 = vmatpush2.msra.mxu0 0.0
        %1249 = vmatprep.subr.mxu0 0.0
        %1250 = vmatpush2.msra.mxu0 0.0
        %1251 = vmatprep.subr.mxu0 0.0
        %1252 = vmatpush2.msra.mxu0 0.0
        %1253 = vmatprep.subr.mxu0 0.0
        %1254 = vmatpush2.msra.mxu0 0.0
        %1255 = vmatprep.subr.mxu0 0.0
        %1256 = vmatpush2.msra.mxu0 0.0
        %1257 = vmatprep.mubr.f32.mxu0 0.0
        %1258 = vmatmul.mubr.f32.gmra.mxu0 %v1191
        %v1259 = vpop.f32.mrf.mxu0
        %v1260 = vadd.f32 0.0, %v1259
        %v1261 = vpop.f32.mrf.mxu0
        %1262 = vdwg.mxu0
        %v1263 = vadd.f32 %v1108, %v1260
        %v1264 = vld [vmem:[%s650] sm:$0xff]
        %s1265 = scalar_lea.vmem %s0, 112
        %v1266 = vld [vmem:[%s1265] sm:$0xff]
        %v1267 = vld [vmem:[%s1265 + $0x8] sm:$0xff]
        %v1269 = vsel %vm192, %v1264, 0
        %1271 = vmatprep.subr.mxu0 0.0
        %1272 = vmatpush1.msra.mxu0 0.0
        %1273 = vmatprep.subr.mxu0 0.0
        %1274 = vmatpush1.msra.mxu0 0.0
        %1275 = vmatprep.subr.mxu0 0.0
        %1276 = vmatpush1.msra.mxu0 0.0
        %1277 = vmatprep.subr.mxu0 0.0
        %1278 = vmatpush1.msra.mxu0 0.0
        %1279 = vmatprep.subr.mxu0 0.0
        %1280 = vmatpush1.msra.mxu0 0.0
        %1281 = vmatprep.subr.mxu0 0.0
        %1282 = vmatpush1.msra.mxu0 0.0
        %1283 = vmatprep.subr.mxu0 0.0
        %1284 = vmatpush1.msra.mxu0 0.0
        %1285 = vmatprep.subr.mxu0 0.0
        %1286 = vmatpush1.msra.mxu0 0.0
        %1287 = vmatprep.subr.mxu0 0.0
        %1288 = vmatpush1.msra.mxu0 0.0
        %1289 = vmatprep.subr.mxu0 0.0
        %1290 = vmatpush1.msra.mxu0 0.0
        %1291 = vmatprep.subr.mxu0 0.0
        %1292 = vmatpush1.msra.mxu0 0.0
        %1293 = vmatprep.subr.mxu0 0.0
        %1294 = vmatpush1.msra.mxu0 0.0
        %1295 = vmatprep.subr.mxu0 0.0
        %1296 = vmatpush1.msra.mxu0 0.0
        %1297 = vmatprep.subr.mxu0 0.0
        %1298 = vmatpush1.msra.mxu0 0.0
        %1299 = vmatprep.subr.mxu0 0.0
        %1300 = vmatpush1.msra.mxu0 %v1267
        %1301 = vmatprep.subr.mxu0 0.0
        %1302 = vmatpush1.msra.mxu0 %v1266
        %1303 = vmatprep.subr.mxu0 0.0
        %1304 = vmatpush2.msra.mxu0 0.0
        %1305 = vmatprep.subr.mxu0 0.0
        %1306 = vmatpush2.msra.mxu0 0.0
        %1307 = vmatprep.subr.mxu0 0.0
        %1308 = vmatpush2.msra.mxu0 0.0
        %1309 = vmatprep.subr.mxu0 0.0
        %1310 = vmatpush2.msra.mxu0 0.0
        %1311 = vmatprep.subr.mxu0 0.0
        %1312 = vmatpush2.msra.mxu0 0.0
        %1313 = vmatprep.subr.mxu0 0.0
        %1314 = vmatpush2.msra.mxu0 0.0
        %1315 = vmatprep.subr.mxu0 0.0
        %1316 = vmatpush2.msra.mxu0 0.0
        %1317 = vmatprep.subr.mxu0 0.0
        %1318 = vmatpush2.msra.mxu0 0.0
        %1319 = vmatprep.subr.mxu0 0.0
        %1320 = vmatpush2.msra.mxu0 0.0
        %1321 = vmatprep.subr.mxu0 0.0
        %1322 = vmatpush2.msra.mxu0 0.0
        %1323 = vmatprep.subr.mxu0 0.0
        %1324 = vmatpush2.msra.mxu0 0.0
        %1325 = vmatprep.subr.mxu0 0.0
        %1326 = vmatpush2.msra.mxu0 0.0
        %1327 = vmatprep.subr.mxu0 0.0
        %1328 = vmatpush2.msra.mxu0 0.0
        %1329 = vmatprep.subr.mxu0 0.0
        %1330 = vmatpush2.msra.mxu0 0.0
        %1331 = vmatprep.subr.mxu0 0.0
        %1332 = vmatpush2.msra.mxu0 0.0
        %1333 = vmatprep.subr.mxu0 0.0
        %1334 = vmatpush2.msra.mxu0 0.0
        %1335 = vmatprep.mubr.f32.mxu0 0.0
        %1336 = vmatmul.mubr.f32.gmra.mxu0 %v1269
        %v1337 = vpop.f32.mrf.mxu0
        %v1338 = vadd.f32 0.0, %v1337
        %v1339 = vpop.f32.mrf.mxu0
        %1340 = vdwg.mxu0
        %v1341 = vld [vmem:[%s728] sm:$0xff]
        %v1342 = vld [vmem:[%s728 + $0x8] sm:$0xff]
        %v1344 = vsel %vm192, %v1338, 0
        %1346 = vmatprep.subr.mxu0 0.0
        %1347 = vmatpush1.msra.mxu0 0.0
        %1348 = vmatprep.subr.mxu0 0.0
        %1349 = vmatpush1.msra.mxu0 0.0
        %1350 = vmatprep.subr.mxu0 0.0
        %1351 = vmatpush1.msra.mxu0 0.0
        %1352 = vmatprep.subr.mxu0 0.0
        %1353 = vmatpush1.msra.mxu0 0.0
        %1354 = vmatprep.subr.mxu0 0.0
        %1355 = vmatpush1.msra.mxu0 0.0
        %1356 = vmatprep.subr.mxu0 0.0
        %1357 = vmatpush1.msra.mxu0 0.0
        %1358 = vmatprep.subr.mxu0 0.0
        %1359 = vmatpush1.msra.mxu0 0.0
        %1360 = vmatprep.subr.mxu0 0.0
        %1361 = vmatpush1.msra.mxu0 0.0
        %1362 = vmatprep.subr.mxu0 0.0
        %1363 = vmatpush1.msra.mxu0 0.0
        %1364 = vmatprep.subr.mxu0 0.0
        %1365 = vmatpush1.msra.mxu0 0.0
        %1366 = vmatprep.subr.mxu0 0.0
        %1367 = vmatpush1.msra.mxu0 0.0
        %1368 = vmatprep.subr.mxu0 0.0
        %1369 = vmatpush1.msra.mxu0 0.0
        %1370 = vmatprep.subr.mxu0 0.0
        %1371 = vmatpush1.msra.mxu0 0.0
        %1372 = vmatprep.subr.mxu0 0.0
        %1373 = vmatpush1.msra.mxu0 0.0
        %1374 = vmatprep.subr.mxu0 0.0
        %1375 = vmatpush1.msra.mxu0 %v1342
        %1376 = vmatprep.subr.mxu0 0.0
        %1377 = vmatpush1.msra.mxu0 %v1341
        %1378 = vmatprep.subr.mxu0 0.0
        %1379 = vmatpush2.msra.mxu0 0.0
        %1380 = vmatprep.subr.mxu0 0.0
        %1381 = vmatpush2.msra.mxu0 0.0
        %1382 = vmatprep.subr.mxu0 0.0
        %1383 = vmatpush2.msra.mxu0 0.0
        %1384 = vmatprep.subr.mxu0 0.0
        %1385 = vmatpush2.msra.mxu0 0.0
        %1386 = vmatprep.subr.mxu0 0.0
        %1387 = vmatpush2.msra.mxu0 0.0
        %1388 = vmatprep.subr.mxu0 0.0
        %1389 = vmatpush2.msra.mxu0 0.0
        %1390 = vmatprep.subr.mxu0 0.0
        %1391 = vmatpush2.msra.mxu0 0.0
        %1392 = vmatprep.subr.mxu0 0.0
        %1393 = vmatpush2.msra.mxu0 0.0
        %1394 = vmatprep.subr.mxu0 0.0
        %1395 = vmatpush2.msra.mxu0 0.0
        %1396 = vmatprep.subr.mxu0 0.0
        %1397 = vmatpush2.msra.mxu0 0.0
        %1398 = vmatprep.subr.mxu0 0.0
        %1399 = vmatpush2.msra.mxu0 0.0
        %1400 = vmatprep.subr.mxu0 0.0
        %1401 = vmatpush2.msra.mxu0 0.0
        %1402 = vmatprep.subr.mxu0 0.0
        %1403 = vmatpush2.msra.mxu0 0.0
        %1404 = vmatprep.subr.mxu0 0.0
        %1405 = vmatpush2.msra.mxu0 0.0
        %1406 = vmatprep.subr.mxu0 0.0
        %1407 = vmatpush2.msra.mxu0 0.0
        %1408 = vmatprep.subr.mxu0 0.0
        %1409 = vmatpush2.msra.mxu0 0.0
        %1410 = vmatprep.mubr.f32.mxu0 0.0
        %1411 = vmatmul.mubr.f32.gmra.mxu0 %v1344
        %v1412 = vpop.f32.mrf.mxu0
        %v1413 = vadd.f32 0.0, %v1412
        %v1414 = vpop.f32.mrf.mxu0
        %1415 = vdwg.mxu0
        %v1416 = vadd.f32 %v1263, %v1413
        %s1417 = scalar_lea.vmem %s178, 8 [#allocation2]
        %1418 = vst.msk [vmem:[%s1417] sm:$0xff] %vm805, %v1416
        %s1419 = sand.u32 %s98, 1
        %s1420 = scalar_lea.sflag [#allocation3], %s1419
        %s1421 = sand.u32 %s98, 1
        %s1422 = smul.addr %s1421, 16
        %s1423 = scalar_lea.vmem [#allocation2], %s1422
        // Predicated region
        $region33: #{tpu_custom_call.1} parent=31 // pred_check
          %p1424 = pneg %p108
        $region34: #{tpu_custom_call.1} parent=31 // pred_check_branch
          %1426 = sbr.rel (%p1424) target = $region36
        $region35: #{tpu_custom_call.1} parent=31 // pred_region
          %s1428 = ssub.s32 256, 256
          %1429 = vsyncadd %s1420, %s1428
          %s1430 = smul.addr %s17, 128
          %s1431 = scalar_lea.hbm %s3, %s1430
          %s1432 = sshll.u32 %s1423, 4
          %s1433 = int_to_ptr.vmem [resolvable:$true] %s1432
          %1438 = dma.vmem_to_hbm [thread:$0]  %s1433, 256, %s1431, %s1420, 128, 384, 8
        $region36: #{tpu_custom_call.1} parent=31 // pred_fallthru
          _
      $region32: #{tpu_custom_call.1} parent=5 // pred_fallthru
        _
      %p1439 = scmp.le.s32.totalorder 2, %s12
      // Predicated region
      $region37: #{tpu_custom_call.1} parent=5 // pred_check
        %p1440 = pneg %p1439
      $region38: #{tpu_custom_call.1} parent=5 // pred_check_branch
        %1442 = sbr.rel (%p1440) target = $region40
      $region39: #{tpu_custom_call.1} parent=5 // pred_region
        %s1443 = ssub.s32 %s12, 2
        // Predicated region
        $region41: #{tpu_custom_call.1} parent=39 // pred_check
          %p1444 = pneg %p114
        $region42: #{tpu_custom_call.1} parent=39 // pred_check_branch
          %1446 = sbr.rel (%p1444) target = $region44
        $region43: #{tpu_custom_call.1} parent=39 // pred_region
          %s1447 = sand.u32 %s99, 1
          %s1448 = scalar_lea.sflag [#allocation3], %s1447
          %s1449 = sand.u32 %s99, 1
          %s1450 = smul.addr %s1449, 16
          %s1451 = scalar_lea.vmem [#allocation2], %s1450
          %1452 = dma.done %s1448, 256
        $region44: #{tpu_custom_call.1} parent=39 // pred_fallthru
          _
      $region40: #{tpu_custom_call.1} parent=5 // pred_fallthru
        _
    $region6: #{tpu_custom_call.1} parent=1 // loop_footer
      %s16 = sadd.s32 1, %s12
    $region7: #{tpu_custom_call.1} parent=1 // loop_footer_branch
      %11 = sbr.rel target = $region3
    $region8: #{tpu_custom_call.1} parent=1 // loop_exit
      _
    %1453 = vsyncpa [#allocation3], 1
    %s1454 = scalar_lea.sflag [#allocation3], 1
    %1455 = vsyncpa %s1454, 1

</llo_original>
